<compile_context>
chip_gen: v7x
topology: tpu7x:2x2x1
jax: 0.10.0
libtpu: 0.0.40
codegen_flags: <defaults>
</compile_context>

<pallas_src>
import functools
import math

import jax
import jax.numpy as jnp
from jax import lax
from jax.experimental import pallas as pl
from jax.experimental.pallas import tpu as pltpu


_LANES = 128
_DEFAULT_BLOCK_BYTES = 4 * 1024 * 1024     # per main stream per grid step
_MIN_PALLAS_ELEMS = 256 * 1024             # below this, plain JAX is faster
_VMEM_SOFT_CAP = 52 * 1024 * 1024          # keep estimated kernel VMEM under this
_VMEM_LIMIT_CAP = 56 * 1024 * 1024         # v7x has only 64 MiB physical VMEM/TC


def _cdiv(a, b):
    return -(-a // b)


def _round_up(a, m):
    return _cdiv(a, m) * m


def _wsl1_kernel(*refs, beta, half_over_beta, half_beta, l1_only, has_cw, has_w):
    it = iter(refs)
    x_ref = next(it)                        # (TR, W)  native input dtype
    t_ref = next(it)                        # (TR, W)  native input dtype
    cw_ref = next(it) if has_cw else None   # (1, W)   f32 (periodic code weights)
    w_ref = next(it) if has_w else None     # (TR, G)  native weights dtype
    e_ref = next(it) if has_w else None     # (G, W)   f32 0/1 expansion matrix
    o_ref = next(it)                        # (TR, W)  f32

    # In-kernel cast: bf16/fp16 inputs never get materialized as f32 in HBM.
    x = x_ref[...].astype(jnp.float32)
    t = t_ref[...].astype(jnp.float32)
    t = jnp.where(jnp.isnan(t), x, t)       # NaN targets -> zero residual
    diff = x - t
    if has_cw:
        diff = diff * cw_ref[...]           # code-wise weights (sublane broadcast)

    n = jnp.abs(diff)
    if l1_only:
        loss = n
    else:
        # 0.5/beta and 0.5*beta are Python constants: no divides on the VPU.
        loss = jnp.where(n < beta, (half_over_beta * n) * n, n - half_beta)

    if has_w:
        # Expand per-anchor weights (TR, G) -> (TR, W = G*C) with one small MXU
        # matmul against a 0/1 expansion matrix.  Exact under HIGHEST precision
        # (single nonzero per output lane); the MXU is otherwise idle so the big
        # streams stay lane dense and the VPU/DMA path is untouched.
        # (On v5e, per-operand/bf16-rhs precision would cut the f32 emulation
        # passes ~3x; kept full f32 HIGHEST here for guaranteed lowering.)
        w_rows = w_ref[...].astype(jnp.float32)
        w_wide = jnp.dot(w_rows, e_ref[...],
                         precision=lax.Precision.HIGHEST,
                         preferred_element_type=jnp.float32)
        loss = loss * w_wide

    o_ref[...] = loss


def _reference(inp, target, code_weights, weights, beta):
    """Plain-JAX mirror of the PyTorch module (also the tiny-shape fallback)."""
    inp = inp.astype(jnp.float32)
    target = target.astype(jnp.float32)
    t = jnp.where(jnp.isnan(target), inp, target)
    diff = inp - t
    if code_weights is not None:
        diff = diff * jnp.asarray(code_weights, jnp.float32).reshape(1, 1, -1)
    n = jnp.abs(diff)
    if beta < 1e-5:
        loss = n
    else:
        loss = jnp.where(n < beta, 0.5 * n * n / beta, n - 0.5 * beta)
    if weights is not None:
        loss = loss * weights.astype(jnp.float32)[..., None]
    return loss


def weighted_smooth_l1_loss(inp, target, code_weights=None, weights=None,
                            beta=1.0 / 9.0, block_bytes=None):
    """Forward pass of WeightedSmoothL1Loss.

    inp, target: (B, #anchors, #codes). weights: (B, #anchors) or None.
    code_weights: (#codes,) or None. Returns (B, #anchors, #codes) float32.
    """
    B, A, C = inp.shape
    assert target.shape == inp.shape
    if weights is not None:
        assert weights.shape[0] == B and weights.shape[1] == A

    n_elems = B * A * C
    if n_elems < _MIN_PALLAS_ELEMS:
        # Launch/step overhead dominates at small sizes; XLA fuses this fine.
        return _reference(inp, target, code_weights, weights, beta)

    if block_bytes is None:
        block_bytes = _DEFAULT_BLOCK_BYTES

    AA = B * A                                    # batch folds into the anchor axis
    g0 = _LANES // math.gcd(C, _LANES)            # smallest group with (g*C)%128==0

    # Largest lane-dense anchor group that divides B*A -> zero-copy reshape,
    # no jnp.pad and no output slice (the common case for real anchor grids).
    G = None
    for g in (128, 64, 32, 16, 8, 4, 2, 1):
        if g % g0 == 0 and AA % g == 0:
            G = g
            break

    x, t, w_arr = inp, target, weights            # native dtypes: cast in-kernel
    padded = G is None
    if padded:
        # TODO(synk): truly ragged B*A (no lane-dense divisor) still takes one
        # padded HBM copy of x/t (+ output slice); a manual-DMA gather path
        # could remove these extra passes.
        G = _LANES
        aa_pad = _round_up(AA, G)
        pad = aa_pad - AA
        x = jnp.pad(inp.reshape(AA, C), ((0, pad), (0, 0)))
        t = jnp.pad(target.reshape(AA, C), ((0, pad), (0, 0)))
        if w_arr is not None:
            w_arr = jnp.pad(w_arr.reshape(AA), ((0, pad),))
        aa_eff = aa_pad
    else:
        aa_eff = AA

    W = G * C                                     # lane width, multiple of 128
    R = aa_eff // G                               # lane-dense rows
    x2 = x.reshape(R, W)                          # free: row-major contiguous
    t2 = t.reshape(R, W)

    has_cw = code_weights is not None
    has_w = weights is not None

    itemsizes = [x2.dtype.itemsize, t2.dtype.itemsize]
    if has_w:
        itemsizes.append(w_arr.dtype.itemsize)
    min_item = min(itemsizes)
    row_align = 8 if min_item >= 4 else (16 if min_item == 2 else 32)

    # Row-tile size: ~block_bytes of f32 per main stream per grid step.  Flat
    # 1-D grid; prefer an even tile count so both v7x TensorCores get work.
    cap = max(row_align, (block_bytes // (W * 4)) // row_align * row_align)
    n_tiles = _cdiv(R, cap) if R > cap else 1
    if n_tiles % 2 == 1 and R >= 2 * row_align:
        n_tiles += 1
    tr = min(R, _round_up(_cdiv(R, n_tiles), row_align))
    n_tiles = _cdiv(R, tr)

    def vmem_needed(tr_):
        main_in = tr_ * W * (itemsizes[0] + itemsizes[1])       # double-buffered
        main_out = tr_ * W * 4
        side = 0
        if has_cw:
            side += 8 * W * 4
        if has_w:
            side += tr_ * max(G, _LANES) * w_arr.dtype.itemsize  # lane-padded
            side += _round_up(G, 8) * W * 4
        temps = 4 * tr_ * W * 4              # in-kernel f32 casts, diff/loss, w_wide
        return 2 * (main_in + main_out + side) + temps

    while vmem_needed(tr) > _VMEM_SOFT_CAP and tr > row_align:
        new_tr = max(row_align, _round_up(tr // 2, row_align))
        if new_tr == tr:
            break
        tr = new_tr
        n_tiles = _cdiv(R, tr)

    args = [x2, t2]
    in_specs = [pl.BlockSpec((tr, W), lambda i: (i, 0)),
                pl.BlockSpec((tr, W), lambda i: (i, 0))]

    flops = 6 * R * W
    bytes_accessed = x2.size * itemsizes[0] + t2.size * itemsizes[1] + R * W * 4

    if has_cw:
        cw = jnp.asarray(code_weights, jnp.float32).reshape(C)
        cw_tiled = jnp.tile(cw, G).reshape(1, W)          # periodic lane pattern
        args.append(cw_tiled)
        in_specs.append(pl.BlockSpec((1, W), lambda i: (0, 0)))
        bytes_accessed += cw_tiled.size * 4

    if has_w:
        w2 = w_arr.reshape(R, G)                          # free reshape
        lane_anchor = jnp.arange(W, dtype=jnp.int32) // C
        expand = (lane_anchor[None, :] ==
                  jnp.arange(G, dtype=jnp.int32)[:, None]).astype(jnp.float32)
        args += [w2, expand]
        in_specs += [pl.BlockSpec((tr, G), lambda i: (i, 0)),
                     pl.BlockSpec((G, W), lambda i: (0, 0))]
        bytes_accessed += w2.size * w2.dtype.itemsize + expand.size * 4
        flops += 2 * R * G * W

    out_spec = pl.BlockSpec((tr, W), lambda i: (i, 0))
    vmem_limit = int(min(max(vmem_needed(tr) + (4 << 20), 32 << 20),
                         _VMEM_LIMIT_CAP))

    kernel = functools.partial(
        _wsl1_kernel,
        beta=float(beta),
        half_over_beta=(0.5 / float(beta)) if beta >= 1e-5 else 0.0,
        half_beta=0.5 * float(beta),
        l1_only=bool(beta < 1e-5),
        has_cw=has_cw,
        has_w=has_w)

    out2 = pl.pallas_call(
        kernel,
        out_shape=jax.ShapeDtypeStruct((R, W), jnp.float32),
        grid=(n_tiles,),
        in_specs=in_specs,
        out_specs=out_spec,
        compiler_params=pltpu.CompilerParams(
            dimension_semantics=("parallel",),
            vmem_limit_bytes=vmem_limit),
        cost_estimate=pl.CostEstimate(
            flops=int(flops), transcendentals=0,
            bytes_accessed=int(bytes_accessed)),
    )(*args)

    if padded:
        return out2.reshape(aa_eff, C)[:AA].reshape(B, A, C)
    return out2.reshape(B, A, C)


if __name__ == "__main__":
    key = jax.random.PRNGKey(0)
    beta_default = 1.0 / 9.0

    def make_case(seed, B, A, C, use_cw, use_w, dtype=jnp.float32):
        k1, k2, k3, k4 = jax.random.split(jax.random.fold_in(key, seed), 4)
        inp = jax.random.normal(k1, (B, A, C), dtype=dtype)
        tgt = jax.random.normal(k2, (B, A, C), dtype=dtype)
        # Exercise the isnan path.
        tgt = tgt.at[0, 0, 0].set(jnp.nan).at[B - 1, A - 1, C - 1].set(jnp.nan)
        cw = (jax.random.uniform(k3, (C,), dtype=jnp.float32) + 0.5) if use_cw else None
        w = jax.random.uniform(k4, (B, A), dtype=jnp.float32) if use_w else None
        return inp, tgt, cw, w

    cases = [
        # (name, B, A, C, use_cw, use_w, beta, dtype, block_bytes)
        # pad-free, adaptive G=32, multi-tile grid with a ragged tail tile
        ("padfree_evenC_multitile", 2, 18000, 8, True,  True,  beta_default,
         jnp.float32, 256 * 1024),
        # pad-free, C=7 -> G=128 (W=896), multi-tile
        ("padfree_oddC",            2, 25600, 7, True,  True,  beta_default,
         jnp.float32, 256 * 1024),
        # ragged B*A with C=7: minimal-pad fallback path (+ output slice)
        ("ragged_padded_fallback",  2, 25000, 7, True,  True,  beta_default,
         jnp.float32, None),
        # bf16 inputs cast in-kernel, L1 path, no weights / code_weights
        ("bf16_l1_noweights",       2, 32768, 8, False, False, 1e-6,
         jnp.bfloat16, None),
        # tiny shape: plain-JAX fallback
        ("tiny_jax_fallback",       2, 128,   7, True,  True,  beta_default,
         jnp.float32, None),
    ]

    for i, (name, B, A, C, use_cw, use_w, b, dt, bb) in enumerate(cases):
        inp, tgt, cw, w = make_case(i, B, A, C, use_cw, use_w, dt)
        out = weighted_smooth_l1_loss(inp, tgt, cw, w, b, block_bytes=bb)
        out = jax.block_until_ready(out)
        ref = _reference(inp, tgt, cw, w, b)
        assert out.shape == (B, A, C), name
        assert out.dtype == jnp.float32, name
        assert bool(jnp.all(jnp.isfinite(out))), name
        err = float(jnp.max(jnp.abs(out - ref)))
        assert bool(jnp.allclose(out, ref, atol=1e-5, rtol=1e-5)), (name, err)

    print("KERNEL_OK")
</pallas_src>

<mosaic_0001>
module attributes {stable_mosaic.version = 11 : i64} {
  func.func @_wsl1_kernel(%arg0: i32, %arg1: memref<192x256xf32, #tpu.memory_space<vmem>>, %arg2: memref<192x256xf32, #tpu.memory_space<vmem>>, %arg3: memref<1x256xf32, #tpu.memory_space<vmem>>, %arg4: memref<192x32xf32, #tpu.memory_space<vmem>>, %arg5: memref<32x256xf32, #tpu.memory_space<vmem>>, %arg6: memref<192x256xf32, #tpu.memory_space<vmem>>) attributes {dimension_semantics = [#tpu.dimension_semantics<parallel>], iteration_bounds = array<i64: 6>, scalar_prefetch = 0 : i64, scratch_operands = 0 : i64, tpu.core_type = #tpu.core_type<tc>, window_params = [{transform_indices = @transform_0, window_bounds = array<i64: 192, 256>}, {transform_indices = @transform_1, window_bounds = array<i64: 192, 256>}, {pipeline_mode = #tpu.pipeline_mode<synchronous>, transform_indices = @transform_2, window_bounds = array<i64: 1, 256>}, {transform_indices = @transform_3, window_bounds = array<i64: 192, 32>}, {pipeline_mode = #tpu.pipeline_mode<synchronous>, transform_indices = @transform_4, window_bounds = array<i64: 32, 256>}, {transform_indices = @transform_5, window_bounds = array<i64: 192, 256>}]} {
    %c0 = arith.constant 0 : index
    %c0_0 = arith.constant 0 : index
    %0 = vector.load %arg1[%c0, %c0_0] : memref<192x256xf32, #tpu.memory_space<vmem>>, vector<192x256xf32>
    %c0_1 = arith.constant 0 : index
    %c0_2 = arith.constant 0 : index
    %1 = vector.load %arg2[%c0_1, %c0_2] : memref<192x256xf32, #tpu.memory_space<vmem>>, vector<192x256xf32>
    %2 = arith.cmpf one, %1, %1 : vector<192x256xf32>
    %3 = arith.select %2, %0, %1 : vector<192x256xi1>, vector<192x256xf32>
    %4 = arith.subf %0, %3 : vector<192x256xf32>
    %c0_3 = arith.constant 0 : index
    %c0_4 = arith.constant 0 : index
    %5 = vector.load %arg3[%c0_3, %c0_4] : memref<1x256xf32, #tpu.memory_space<vmem>>, vector<1x256xf32>
    %6 = vector.broadcast %5 : vector<1x256xf32> to vector<192x256xf32>
    %7 = arith.mulf %4, %6 : vector<192x256xf32>
    %8 = math.absf %7 : vector<192x256xf32>
    %cst = arith.constant 0.111111112 : f32
    %9 = vector.broadcast %cst : f32 to vector<192x256xf32>
    %10 = arith.cmpf olt, %8, %9 : vector<192x256xf32>
    %cst_5 = arith.constant 4.500000e+00 : f32
    %11 = vector.broadcast %cst_5 : f32 to vector<192x256xf32>
    %12 = arith.mulf %11, %8 : vector<192x256xf32>
    %13 = arith.mulf %12, %8 : vector<192x256xf32>
    %cst_6 = arith.constant 0.055555556 : f32
    %14 = vector.broadcast %cst_6 : f32 to vector<192x256xf32>
    %15 = arith.subf %8, %14 : vector<192x256xf32>
    %16 = arith.select %10, %13, %15 : vector<192x256xi1>, vector<192x256xf32>
    %c0_7 = arith.constant 0 : index
    %c0_8 = arith.constant 0 : index
    %17 = vector.load %arg4[%c0_7, %c0_8] : memref<192x32xf32, #tpu.memory_space<vmem>>, vector<192x32xf32>
    %c0_9 = arith.constant 0 : index
    %c0_10 = arith.constant 0 : index
    %18 = vector.load %arg5[%c0_9, %c0_10] : memref<32x256xf32, #tpu.memory_space<vmem>>, vector<32x256xf32>
    %cst_11 = arith.constant dense<0.000000e+00> : vector<192x256xf32>
    %19 = tpu.matmul %17, %18, %cst_11 {dimension_numbers = #tpu.dot_dimension_numbers<[1], [0], [0], [1], [0, 0, 1, 1], [], []>, precision = #tpu.contract_precision<fp32>} : vector<192x32xf32>, vector<32x256xf32>, vector<192x256xf32> -> vector<192x256xf32>
    %20 = arith.mulf %16, %19 : vector<192x256xf32>
    %c0_12 = arith.constant 0 : index
    %c0_13 = arith.constant 0 : index
    %21 = vector.load %arg6[%c0_12, %c0_13] : memref<192x256xf32, #tpu.memory_space<vmem>>, vector<192x256xf32>
    tpu.vector_store %arg6[%c0_12, %c0_13], %20 {strides = array<i32>} : memref<192x256xf32, #tpu.memory_space<vmem>>, vector<192x256xf32>,
    return
  }
  func.func @transform_0(%arg0: i32) -> (i32, i32) {
    %c0_i32 = arith.constant 0 : i32
    %c0_i32_0 = arith.constant 0 : i32
    return %arg0, %c0_i32 : i32, i32
  }
  func.func @transform_1(%arg0: i32) -> (i32, i32) {
    %c0_i32 = arith.constant 0 : i32
    %c0_i32_0 = arith.constant 0 : i32
    return %arg0, %c0_i32 : i32, i32
  }
  func.func @transform_2(%arg0: i32) -> (i32, i32) {
    %c0_i32 = arith.constant 0 : i32
    %c0_i32_0 = arith.constant 0 : i32
    %c0_i32_1 = arith.constant 0 : i32
    return %c0_i32, %c0_i32_0 : i32, i32
  }
  func.func @transform_3(%arg0: i32) -> (i32, i32) {
    %c0_i32 = arith.constant 0 : i32
    %c0_i32_0 = arith.constant 0 : i32
    return %arg0, %c0_i32 : i32, i32
  }
  func.func @transform_4(%arg0: i32) -> (i32, i32) {
    %c0_i32 = arith.constant 0 : i32
    %c0_i32_0 = arith.constant 0 : i32
    %c0_i32_1 = arith.constant 0 : i32
    return %c0_i32, %c0_i32_0 : i32, i32
  }
  func.func @transform_5(%arg0: i32) -> (i32, i32) {
    %c0_i32 = arith.constant 0 : i32
    %c0_i32_0 = arith.constant 0 : i32
    return %arg0, %c0_i32 : i32, i32
  }
}

</mosaic_0001>

<llo_original>
// kernel: tpu_custom_call.1
$region0: #{tpu_custom_call.1}
  #allocation0 [shape = 'u32[]', space=smem, size = 0x4, offset = 0x4, fixed_abs, tag = 'smem constant byte address 0x4 - core index']
  #allocation1 [shape = 'u32[144,128]{1,0:T(1,128)}', space=vmem, size = 0x12000, scoped, tag = 'internal scratch']
  %s0 = inlined_call_operand.hbm [shape: f32[1125,256], index: 0, kind: input, shape index: {}]
  %s1 = inlined_call_operand.hbm [shape: f32[1125,256], index: 1, kind: input, shape index: {}]
  %s2 = inlined_call_operand.hbm [shape: f32[1,256], index: 2, kind: input, shape index: {}]
  %s3 = inlined_call_operand.vmem [shape: f32[1125,32], index: 3, kind: input, shape index: {}]
  %s4 = inlined_call_operand.hbm [shape: f32[32,256], index: 4, kind: input, shape index: {}]
  %s5 = inlined_call_operand.hbm [shape: f32[1125,256], index: 5, kind: output, shape index: {}]
  %s6 = sld [smem:[#allocation0]]
  $region69: #{tpu_custom_call.1} parent=0
    _
  %s8 = ssub.s32 1, %s6
  %s9 = scalar_select 0, %s8, %s6
  $region1: #{tpu_custom_call.1} parent=0
    #allocation2 [shape = 'u8[393216]{0}', space=vmem, size = 0x60000, scoped, tag = 'input window, operand 0']
    #allocation3 [shape = 's32[2]{0}', space=sflag, size = 0x8, scoped, tag = 'scoped memory for tpu_custom_call.1']
    #allocation4 [shape = 's32[2]{0}', space=sflag, size = 0x8, scoped, tag = 'scoped memory for tpu_custom_call.1']
    #allocation5 [shape = 'u8[393216]{0}', space=vmem, size = 0x60000, scoped, tag = 'input window, operand 1']
    #allocation6 [shape = 's32[2]{0}', space=sflag, size = 0x8, scoped, tag = 'scoped memory for tpu_custom_call.1']
    #allocation7 [shape = 'u8[1024]{0}', space=vmem, size = 0x400, scoped, tag = 'input window, operand 2, single buffered']
    #allocation8 [shape = 'u8[32768]{0}', space=vmem, size = 0x8000, scoped, tag = 'input window, operand 4, single buffered']
    #allocation9 [shape = 's32[1]{0}', space=sflag, size = 0x4, scoped, tag = 'scoped memory for tpu_custom_call.1']
    #allocation10 [shape = 'u8[393216]{0}', space=vmem, size = 0x60000, scoped, tag = 'output window, operand 0']
    %10 = vsyncpa [#allocation3], 0
    %s11 = scalar_lea.sflag [#allocation3], 1
    %12 = vsyncpa %s11, 0
    %13 = vsyncpa [#allocation6], 0
    %s14 = scalar_lea.sflag [#allocation6], 1
    %15 = vsyncpa %s14, 0
    %16 = vsyncpa [#allocation9], 0
    %17 = vsyncpa [#allocation4], 0
    %s18 = scalar_lea.sflag [#allocation4], 1
    %19 = vsyncpa %s18, 0
    loop: start=0, step=1, limit=8
    $region2: #{tpu_custom_call.1} parent=1 // loop_pre_header
      _
    $region3: #{tpu_custom_call.1} parent=1 // loop_header
      %s21 = sphi 0, %s25
      %p22 = scmp.ge.s32.totalorder %s21, 8
      %s31 = sphi 0, %s33
      %s34 = sphi 0, %s31
      %s35 = sphi 0, %s34
      %s51 = sphi 0, %s35
      %s57 = sphi 0, %s59
      %s60 = sphi 0, %s57
      %s61 = sphi 0, %s60
      %s77 = sphi 0, %s61
      %s81 = sphi 0, %s81
      %s83 = sphi 0, %s81
      %s84 = sphi 0, %s83
      %s98 = sphi 0, %s84
      %s104 = sphi 0, %s106
      %s107 = sphi 0, %s104
      %s108 = sphi 0, %s107
      %s124 = sphi 0, %s108
      %s128 = sphi 0, %s128
      %s130 = sphi 0, %s128
      %s131 = sphi 0, %s130
      %s145 = sphi 0, %s131
      %s151 = sphi 0, %s153
      %s154 = sphi 0, %s151
      %s155 = sphi 0, %s154
      %s171 = sphi 0, %s155
    $region4: #{tpu_custom_call.1} parent=1 // loop_header_branch
      %24 = sbr.rel (%p22) target = $region8
    $region5: #{tpu_custom_call.1} parent=1 // loop_body
      %s26 = ssub.s32 %s21, 1
      %s27 = ssub.s32 %s21, 2
      %s28 = sadd.s32 %s21, 1
      %s29 = ssub.s32 %s21, %s28
      %p30 = scmp.eq.s32.totalorder %s29, 0
      %s32 = sadd.s32 %s31, 1
      %s33 = scalar_select %p30, %s31, %s32
      %p36 = pneg %p30
      %p37 = scmp.eq.s32.totalorder %s21, 5
      %p38 = por %p36, %p37
      %p39 = scmp.ne.s32.totalorder %s31, %s34
      %p40 = scmp.eq.s32.totalorder %s21, 0
      %p41 = por %p39, %p40
      %p42 = scmp.ne.s32.totalorder %s31, %s34
      %p43 = scmp.eq.s32.totalorder %s26, 5
      %p44 = por %p42, %p43
      %p45 = scmp.ne.s32.totalorder %s34, %s35
      %p46 = scmp.eq.s32.totalorder %s26, 0
      %p47 = por %p45, %p46
      %p48 = scmp.ne.s32.totalorder %s34, %s35
      %p49 = scmp.eq.s32.totalorder %s27, 5
      %p50 = por %p48, %p49
      %p52 = scmp.ne.s32.totalorder %s35, %s51
      %p53 = scmp.eq.s32.totalorder %s27, 0
      %p54 = por %p52, %p53
      %s55 = ssub.s32 %s21, %s28
      %p56 = scmp.eq.s32.totalorder %s55, 0
      %s58 = sadd.s32 %s57, 1
      %s59 = scalar_select %p56, %s57, %s58
      %p62 = pneg %p56
      %p63 = scmp.eq.s32.totalorder %s21, 5
      %p64 = por %p62, %p63
      %p65 = scmp.ne.s32.totalorder %s57, %s60
      %p66 = scmp.eq.s32.totalorder %s21, 0
      %p67 = por %p65, %p66
      %p68 = scmp.ne.s32.totalorder %s57, %s60
      %p69 = scmp.eq.s32.totalorder %s26, 5
      %p70 = por %p68, %p69
      %p71 = scmp.ne.s32.totalorder %s60, %s61
      %p72 = scmp.eq.s32.totalorder %s26, 0
      %p73 = por %p71, %p72
      %p74 = scmp.ne.s32.totalorder %s60, %s61
      %p75 = scmp.eq.s32.totalorder %s27, 5
      %p76 = por %p74, %p75
      %p78 = scmp.ne.s32.totalorder %s61, %s77
      %p79 = scmp.eq.s32.totalorder %s27, 0
      %p80 = por %p78, %p79
      %s82 = sadd.s32 %s81, 1
      %p85 = scmp.eq.s32.totalorder %s21, 5
      %p86 = scmp.ne.s32.totalorder %s81, %s83
      %p87 = scmp.eq.s32.totalorder %s21, 0
      %p88 = por %p86, %p87
      %p89 = scmp.ne.s32.totalorder %s81, %s83
      %p90 = scmp.eq.s32.totalorder %s26, 5
      %p91 = por %p89, %p90
      %p92 = scmp.ne.s32.totalorder %s83, %s84
      %p93 = scmp.eq.s32.totalorder %s26, 0
      %p94 = por %p92, %p93
      %p95 = scmp.ne.s32.totalorder %s83, %s84
      %p96 = scmp.eq.s32.totalorder %s27, 5
      %p97 = por %p95, %p96
      %p99 = scmp.ne.s32.totalorder %s84, %s98
      %p100 = scmp.eq.s32.totalorder %s27, 0
      %p101 = por %p99, %p100
      %s102 = ssub.s32 %s21, %s28
      %p103 = scmp.eq.s32.totalorder %s102, 0
      %s105 = sadd.s32 %s104, 1
      %s106 = scalar_select %p103, %s104, %s105
      %p109 = pneg %p103
      %p110 = scmp.eq.s32.totalorder %s21, 5
      %p111 = por %p109, %p110
      %p112 = scmp.ne.s32.totalorder %s104, %s107
      %p113 = scmp.eq.s32.totalorder %s21, 0
      %p114 = por %p112, %p113
      %p115 = scmp.ne.s32.totalorder %s104, %s107
      %p116 = scmp.eq.s32.totalorder %s26, 5
      %p117 = por %p115, %p116
      %p118 = scmp.ne.s32.totalorder %s107, %s108
      %p119 = scmp.eq.s32.totalorder %s26, 0
      %p120 = por %p118, %p119
      %p121 = scmp.ne.s32.totalorder %s107, %s108
      %p122 = scmp.eq.s32.totalorder %s27, 5
      %p123 = por %p121, %p122
      %p125 = scmp.ne.s32.totalorder %s108, %s124
      %p126 = scmp.eq.s32.totalorder %s27, 0
      %p127 = por %p125, %p126
      %s129 = sadd.s32 %s128, 1
      %p132 = scmp.eq.s32.totalorder %s21, 5
      %p133 = scmp.ne.s32.totalorder %s128, %s130
      %p134 = scmp.eq.s32.totalorder %s21, 0
      %p135 = por %p133, %p134
      %p136 = scmp.ne.s32.totalorder %s128, %s130
      %p137 = scmp.eq.s32.totalorder %s26, 5
      %p138 = por %p136, %p137
      %p139 = scmp.ne.s32.totalorder %s130, %s131
      %p140 = scmp.eq.s32.totalorder %s26, 0
      %p141 = por %p139, %p140
      %p142 = scmp.ne.s32.totalorder %s130, %s131
      %p143 = scmp.eq.s32.totalorder %s27, 5
      %p144 = por %p142, %p143
      %p146 = scmp.ne.s32.totalorder %s131, %s145
      %p147 = scmp.eq.s32.totalorder %s27, 0
      %p148 = por %p146, %p147
      %s149 = ssub.s32 %s21, %s28
      %p150 = scmp.eq.s32.totalorder %s149, 0
      %s152 = sadd.s32 %s151, 1
      %s153 = scalar_select %p150, %s151, %s152
      %p156 = pneg %p150
      %p157 = scmp.eq.s32.totalorder %s21, 5
      %p158 = por %p156, %p157
      %p159 = scmp.ne.s32.totalorder %s151, %s154
      %p160 = scmp.eq.s32.totalorder %s21, 0
      %p161 = por %p159, %p160
      %p162 = scmp.ne.s32.totalorder %s151, %s154
      %p163 = scmp.eq.s32.totalorder %s26, 5
      %p164 = por %p162, %p163
      %p165 = scmp.ne.s32.totalorder %s154, %s155
      %p166 = scmp.eq.s32.totalorder %s26, 0
      %p167 = por %p165, %p166
      %p168 = scmp.ne.s32.totalorder %s154, %s155
      %p169 = scmp.eq.s32.totalorder %s27, 5
      %p170 = por %p168, %p169
      %p172 = scmp.ne.s32.totalorder %s155, %s171
      %p173 = scmp.eq.s32.totalorder %s27, 0
      %p174 = por %p172, %p173
      %p175 = scmp.le.s32.totalorder 1, %s21
      %p176 = scmp.lt.s32.totalorder %s21, 7
      %p177 = pnand %p175, %p176
      %p178 = pneg %p177
      // Predicated region
      $region9: #{tpu_custom_call.1} parent=5 // pred_check
        _
      $region10: #{tpu_custom_call.1} parent=5 // pred_check_branch
        %180 = sbr.rel (%p177) target = $region12
      $region11: #{tpu_custom_call.1} parent=5 // pred_region
        %s181 = ssub.s32 %s21, 1
        // Predicated region
        $region13: #{tpu_custom_call.1} parent=11 // pred_check
          %p182 = pneg %p94
        $region14: #{tpu_custom_call.1} parent=11 // pred_check_branch
          %184 = sbr.rel (%p182) target = $region16
        $region15: #{tpu_custom_call.1} parent=11 // pred_region
          %s186 = ssub.s32 32, 32
          %187 = vsyncadd [#allocation6], %s186
          %s189 = sshll.u32 [#allocation7], 4
          %s190 = int_to_ptr.vmem [resolvable:$true] %s189
          %192 = dma.hbm_to_vmem [thread:$0]  %s2, 32, %s190, [#allocation6]
        $region16: #{tpu_custom_call.1} parent=11 // pred_fallthru
          _
        // Predicated region
        $region17: #{tpu_custom_call.1} parent=11 // pred_check
          %p193 = pneg %p141
        $region18: #{tpu_custom_call.1} parent=11 // pred_check_branch
          %195 = sbr.rel (%p193) target = $region20
        $region19: #{tpu_custom_call.1} parent=11 // pred_region
          %s197 = ssub.s32 1024, 1024
          %198 = vsyncadd [#allocation9], %s197
          %s199 = sshll.u32 [#allocation8], 4
          %s200 = int_to_ptr.vmem [resolvable:$true] %s199
          %205 = dma.hbm_to_vmem [thread:$0]  %s4, 1024, %s200, [#allocation9], 256, 256, 16
        $region20: #{tpu_custom_call.1} parent=11 // pred_fallthru
          _
      $region12: #{tpu_custom_call.1} parent=5 // pred_fallthru
        _
      %p206 = scmp.lt.s32.totalorder %s21, 6
      // Predicated region
      $region21: #{tpu_custom_call.1} parent=5 // pred_check
        %p207 = pneg %p206
      $region22: #{tpu_custom_call.1} parent=5 // pred_check_branch
        %209 = sbr.rel (%p207) target = $region24
      $region23: #{tpu_custom_call.1} parent=5 // pred_region
        // Predicated region
        $region25: #{tpu_custom_call.1} parent=23 // pred_check
          %p210 = pneg %p41
        $region26: #{tpu_custom_call.1} parent=23 // pred_check_branch
          %212 = sbr.rel (%p210) target = $region28
        $region27: #{tpu_custom_call.1} parent=23 // pred_region
          %s213 = sand.u32 %s31, 1
          %s214 = scalar_lea.sflag [#allocation3], %s213
          %s215 = sand.u32 %s31, 1
          %s216 = smul.addr %s215, 384
          %s217 = scalar_lea.vmem [#allocation2], %s216
          %s218 = smul.u32 24, %s21
          %s219 = ssub.s32 141, %s218
          %p220 = scmp.lt.s32.totalorder %s219, 24
          %s221 = scalar_select %p220, %s219, 24
          %s222 = smul.u32 128, %s221
          %s223 = smul.u32 %s222, 2
          %s225 = ssub.s32 6144, %s223
          %226 = vsyncadd %s214, %s225
          %p227 = scmp.ne.s32.totalorder 0, %s223
          %s228 = smul.addr %s218, 2
          %s229 = smul.addr %s228, 128
          %s230 = scalar_lea.hbm %s0, %s229
          %s231 = smul.u32 16, %s221
          %s232 = sshll.u32 %s217, 4
          %s233 = int_to_ptr.vmem [resolvable:$true] %s232
          %s234 = sshll.u32 %s231, 4
          %238 = dma.hbm_to_vmem [thread:$0]  (%p227), %s230, %s234, %s233, %s214, 256, 256, 16
        $region28: #{tpu_custom_call.1} parent=23 // pred_fallthru
          _
        // Predicated region
        $region29: #{tpu_custom_call.1} parent=23 // pred_check
          %p239 = pneg %p67
        $region30: #{tpu_custom_call.1} parent=23 // pred_check_branch
          %241 = sbr.rel (%p239) target = $region32
        $region31: #{tpu_custom_call.1} parent=23 // pred_region
          %s242 = sand.u32 %s21, 1
          %s243 = scalar_lea.sflag [#allocation6], %s242
          %s244 = sand.u32 %s57, 1
          %s245 = smul.addr %s244, 384
          %s246 = scalar_lea.vmem [#allocation5], %s245
          %s247 = smul.u32 24, %s21
          %s248 = ssub.s32 141, %s247
          %p249 = scmp.lt.s32.totalorder %s248, 24
          %s250 = scalar_select %p249, %s248, 24
          %s251 = smul.u32 128, %s250
          %s252 = smul.u32 %s251, 2
          %s254 = ssub.s32 6144, %s252
          %255 = vsyncadd %s243, %s254
          %p256 = scmp.ne.s32.totalorder 0, %s252
          %s257 = smul.addr %s247, 2
          %s258 = smul.addr %s257, 128
          %s259 = scalar_lea.hbm %s1, %s258
          %s260 = smul.u32 16, %s250
          %s261 = sshll.u32 %s246, 4
          %s262 = int_to_ptr.vmem [resolvable:$true] %s261
          %s263 = sshll.u32 %s260, 4
          %267 = dma.hbm_to_vmem [thread:$0]  (%p256), %s259, %s263, %s262, %s243, 256, 256, 16
        $region32: #{tpu_custom_call.1} parent=23 // pred_fallthru
          _
        // Predicated region
        $region33: #{tpu_custom_call.1} parent=23 // pred_check
          %p268 = pneg %p114
        $region34: #{tpu_custom_call.1} parent=23 // pred_check_branch
          %270 = sbr.rel (%p268) target = $region36
        $region35: #{tpu_custom_call.1} parent=23 // pred_region
          %s271 = smul.u32 24, %s21
          %s272 = ssub.s32 141, %s271
          %p273 = scmp.lt.s32.totalorder %s272, 24
          %s274 = scalar_select %p273, %s272, 24
          %s275 = smul.u32 128, %s274
          %p276 = scmp.lt.s32.totalorder %s271, 140
          %s277 = scalar_select %p276, %s271, 140
          %s278 = smul.addr %s277, 8
          %s279 = scalar_lea.vmem %s3, %s278
          %s280 = smul.u32 24, %s21
          %s281 = ssub.s32 141, %s280
          %p282 = scmp.lt.s32.totalorder %s281, 24
          %s283 = scalar_select %p282, %s281, 24
          %s284 = smul.u32 128, %s283
        $region36: #{tpu_custom_call.1} parent=23 // pred_fallthru
          _
      $region24: #{tpu_custom_call.1} parent=5 // pred_fallthru
        _
      %p285 = scmp.le.s32.totalorder 1, %s21
      %p286 = scmp.lt.s32.totalorder %s21, 7
      %p287 = pnand %p285, %p286
      %p288 = pneg %p287
      // Predicated region
      $region37: #{tpu_custom_call.1} parent=5 // pred_check
        _
      $region38: #{tpu_custom_call.1} parent=5 // pred_check_branch
        %290 = sbr.rel (%p287) target = $region40
      $region39: #{tpu_custom_call.1} parent=5 // pred_region
        %s291 = ssub.s32 %s21, 1
        %s292 = sand.u32 %s34, 1
        %s293 = scalar_lea.sflag [#allocation3], %s292
        %s294 = sand.u32 %s34, 1
        %s295 = smul.addr %s294, 384
        %s296 = scalar_lea.vmem [#allocation2], %s295
        // Predicated region
        $region41: #{tpu_custom_call.1} parent=39 // pred_check
          %p297 = pneg %p47
        $region42: #{tpu_custom_call.1} parent=39 // pred_check_branch
          %299 = sbr.rel (%p297) target = $region44
        $region43: #{tpu_custom_call.1} parent=39 // pred_region
          %300 = dma.done %s293, 6144
        $region44: #{tpu_custom_call.1} parent=39 // pred_fallthru
          _
        %s301 = sand.u32 %s26, 1
        %s302 = scalar_lea.sflag [#allocation6], %s301
        %s303 = sand.u32 %s60, 1
        %s304 = smul.addr %s303, 384
        %s305 = scalar_lea.vmem [#allocation5], %s304
        // Predicated region
        $region45: #{tpu_custom_call.1} parent=39 // pred_check
          %p306 = pneg %p73
        $region46: #{tpu_custom_call.1} parent=39 // pred_check_branch
          %308 = sbr.rel (%p306) target = $region48
        $region47: #{tpu_custom_call.1} parent=39 // pred_region
          %309 = dma.done %s302, 6144
        $region48: #{tpu_custom_call.1} parent=39 // pred_fallthru
          _
        // Predicated region
        $region49: #{tpu_custom_call.1} parent=39 // pred_check
          %p310 = pneg %p94
        $region50: #{tpu_custom_call.1} parent=39 // pred_check_branch
          %312 = sbr.rel (%p310) target = $region52
        $region51: #{tpu_custom_call.1} parent=39 // pred_region
          %313 = dma.done [#allocation6], 32
        $region52: #{tpu_custom_call.1} parent=39 // pred_fallthru
          _
        // Predicated region
        $region53: #{tpu_custom_call.1} parent=39 // pred_check
          %p314 = pneg %p141
        $region54: #{tpu_custom_call.1} parent=39 // pred_check_branch
          %316 = sbr.rel (%p314) target = $region56
        $region55: #{tpu_custom_call.1} parent=39 // pred_region
          %317 = dma.done [#allocation9], 1024
        $region56: #{tpu_custom_call.1} parent=39 // pred_fallthru
          _
        %s318 = sand.u32 %s34, 1
        %s319 = scalar_lea.sflag [#allocation3], %s318
        %s320 = sand.u32 %s34, 1
        %s321 = smul.addr %s320, 384
        %s322 = scalar_lea.vmem [#allocation2], %s321
        %p323 = pneg %p47
        %p324 = pneg %p44
        %s325 = sand.u32 %s26, 1
        %s326 = scalar_lea.sflag [#allocation6], %s325
        %s327 = sand.u32 %s60, 1
        %s328 = smul.addr %s327, 384
        %s329 = scalar_lea.vmem [#allocation5], %s328
        %p330 = pneg %p73
        %p331 = pneg %p70
        %p332 = pneg %p94
        %p333 = pneg %p91
        %s334 = smul.u32 24, %s26
        %s335 = ssub.s32 141, %s334
        %p336 = scmp.lt.s32.totalorder %s335, 24
        %s337 = scalar_select %p336, %s335, 24
        %s338 = smul.u32 128, %s337
        %p339 = scmp.lt.s32.totalorder %s334, 140
        %s340 = scalar_select %p339, %s334, 140
        %s341 = smul.addr %s340, 8
        %s342 = scalar_lea.vmem %s3, %s341
        %p343 = pneg %p120
        %p344 = pneg %p117
        %p345 = pneg %p141
        %p346 = pneg %p138
        %p347 = pneg %p167
        %p348 = pneg %p164
        %s349 = sand.u32 %s154, 1
        %s350 = scalar_lea.sflag [#allocation4], %s349
        %s351 = sand.u32 %s154, 1
        %s352 = smul.addr %s351, 384
        %s353 = scalar_lea.vmem [#allocation10], %s352
        %s354 = smul.u32 24, %s26
        %s355 = ssub.s32 141, %s354
        %p356 = scmp.lt.s32.totalorder %s355, 24
        %s357 = scalar_select %p356, %s355, 24
        %s358 = smul.u32 128, %s357
        %s359 = smul.u32 %s358, 2
        %s360 = smul.u32 24, %s26
        %s361 = ssub.s32 141, %s360
        %p362 = scmp.lt.s32.totalorder %s361, 24
        %s363 = scalar_select %p362, %s361, 24
        %s364 = smul.u32 128, %s363
        %s365 = smul.u32 %s364, 2
        %s366 = smul.u32 24, %s26
        %s367 = ssub.s32 141, %s366
        %p368 = scmp.lt.s32.totalorder %s367, 24
        %s369 = scalar_select %p368, %s367, 24
        %s370 = smul.u32 128, %s369
        %p371 = scmp.lt.s32.totalorder %s366, 140
        %s372 = scalar_select %p371, %s366, 140
        %s373 = smul.addr %s372, 8
        %s374 = scalar_lea.vmem %s3, %s373
        %s375 = smul.u32 24, %s26
        %s376 = ssub.s32 141, %s375
        %p377 = scmp.lt.s32.totalorder %s376, 24
        %s378 = scalar_select %p377, %s376, 24
        %s379 = smul.u32 128, %s378
        %s380 = smul.u32 24, %s26
        %s381 = ssub.s32 141, %s380
        %p382 = scmp.lt.s32.totalorder %s381, 24
        %s383 = scalar_select %p382, %s381, 24
        %s384 = smul.u32 128, %s383
        %s385 = smul.u32 %s384, 2
        %v386 = vld [vmem:[%s296] sm:$0xff]
        %v387 = vld [vmem:[%s296 + $0x8] sm:$0xff]
        %v388 = vld [vmem:[%s296 + $0x10] sm:$0xff]
        %v389 = vld [vmem:[%s296 + $0x18] sm:$0xff]
        %v390 = vld [vmem:[%s296 + $0x20] sm:$0xff]
        %v391 = vld [vmem:[%s296 + $0x28] sm:$0xff]
        %v392 = vld [vmem:[%s296 + $0x30] sm:$0xff]
        %v393 = vld [vmem:[%s296 + $0x38] sm:$0xff]
        %v394 = vld [vmem:[%s296 + $0x40] sm:$0xff]
        %v395 = vld [vmem:[%s296 + $0x48] sm:$0xff]
        %v396 = vld [vmem:[%s296 + $0x50] sm:$0xff]
        %v397 = vld [vmem:[%s296 + $0x58] sm:$0xff]
        %v398 = vld [vmem:[%s296 + $0x60] sm:$0xff]
        %v399 = vld [vmem:[%s296 + $0x68] sm:$0xff]
        %v400 = vld [vmem:[%s296 + $0x70] sm:$0xff]
        %v401 = vld [vmem:[%s296 + $0x78] sm:$0xff]
        %v402 = vld [vmem:[%s296 + $0x80] sm:$0xff]
        %v403 = vld [vmem:[%s296 + $0x88] sm:$0xff]
        %v404 = vld [vmem:[%s296 + $0x90] sm:$0xff]
        %v405 = vld [vmem:[%s296 + $0x98] sm:$0xff]
        %v406 = vld [vmem:[%s296 + $0xa0] sm:$0xff]
        %v407 = vld [vmem:[%s296 + $0xa8] sm:$0xff]
        %v408 = vld [vmem:[%s296 + $0xb0] sm:$0xff]
        %v409 = vld [vmem:[%s296 + $0xb8] sm:$0xff]
        %v410 = vld [vmem:[%s296 + $0xc0] sm:$0xff]
        %v411 = vld [vmem:[%s296 + $0xc8] sm:$0xff]
        %v412 = vld [vmem:[%s296 + $0xd0] sm:$0xff]
        %v413 = vld [vmem:[%s296 + $0xd8] sm:$0xff]
        %v414 = vld [vmem:[%s296 + $0xe0] sm:$0xff]
        %v415 = vld [vmem:[%s296 + $0xe8] sm:$0xff]
        %v416 = vld [vmem:[%s296 + $0xf0] sm:$0xff]
        %v417 = vld [vmem:[%s296 + $0xf8] sm:$0xff]
        %v418 = vld [vmem:[%s296 + $0x100] sm:$0xff]
        %v419 = vld [vmem:[%s296 + $0x108] sm:$0xff]
        %v420 = vld [vmem:[%s296 + $0x110] sm:$0xff]
        %v421 = vld [vmem:[%s296 + $0x118] sm:$0xff]
        %v422 = vld [vmem:[%s296 + $0x120] sm:$0xff]
        %v423 = vld [vmem:[%s296 + $0x128] sm:$0xff]
        %v424 = vld [vmem:[%s296 + $0x130] sm:$0xff]
        %v425 = vld [vmem:[%s296 + $0x138] sm:$0xff]
        %v426 = vld [vmem:[%s296 + $0x140] sm:$0xff]
        %v427 = vld [vmem:[%s296 + $0x148] sm:$0xff]
        %v428 = vld [vmem:[%s296 + $0x150] sm:$0xff]
        %v429 = vld [vmem:[%s296 + $0x158] sm:$0xff]
        %v430 = vld [vmem:[%s296 + $0x160] sm:$0xff]
        %v431 = vld [vmem:[%s296 + $0x168] sm:$0xff]
        %v432 = vld [vmem:[%s296 + $0x170] sm:$0xff]
        %v433 = vld [vmem:[%s296 + $0x178] sm:$0xff]
        %v434 = vld [vmem:[%s305] sm:$0xff]
        %v435 = vld [vmem:[%s305 + $0x8] sm:$0xff]
        %v436 = vld [vmem:[%s305 + $0x10] sm:$0xff]
        %v437 = vld [vmem:[%s305 + $0x18] sm:$0xff]
        %v438 = vld [vmem:[%s305 + $0x20] sm:$0xff]
        %v439 = vld [vmem:[%s305 + $0x28] sm:$0xff]
        %v440 = vld [vmem:[%s305 + $0x30] sm:$0xff]
        %v441 = vld [vmem:[%s305 + $0x38] sm:$0xff]
        %v442 = vld [vmem:[%s305 + $0x40] sm:$0xff]
        %v443 = vld [vmem:[%s305 + $0x48] sm:$0xff]
        %v444 = vld [vmem:[%s305 + $0x50] sm:$0xff]
        %v445 = vld [vmem:[%s305 + $0x58] sm:$0xff]
        %v446 = vld [vmem:[%s305 + $0x60] sm:$0xff]
        %v447 = vld [vmem:[%s305 + $0x68] sm:$0xff]
        %v448 = vld [vmem:[%s305 + $0x70] sm:$0xff]
        %v449 = vld [vmem:[%s305 + $0x78] sm:$0xff]
        %v450 = vld [vmem:[%s305 + $0x80] sm:$0xff]
        %v451 = vld [vmem:[%s305 + $0x88] sm:$0xff]
        %v452 = vld [vmem:[%s305 + $0x90] sm:$0xff]
        %v453 = vld [vmem:[%s305 + $0x98] sm:$0xff]
        %v454 = vld [vmem:[%s305 + $0xa0] sm:$0xff]
        %v455 = vld [vmem:[%s305 + $0xa8] sm:$0xff]
        %v456 = vld [vmem:[%s305 + $0xb0] sm:$0xff]
        %v457 = vld [vmem:[%s305 + $0xb8] sm:$0xff]
        %v458 = vld [vmem:[%s305 + $0xc0] sm:$0xff]
        %v459 = vld [vmem:[%s305 + $0xc8] sm:$0xff]
        %v460 = vld [vmem:[%s305 + $0xd0] sm:$0xff]
        %v461 = vld [vmem:[%s305 + $0xd8] sm:$0xff]
        %v462 = vld [vmem:[%s305 + $0xe0] sm:$0xff]
        %v463 = vld [vmem:[%s305 + $0xe8] sm:$0xff]
        %v464 = vld [vmem:[%s305 + $0xf0] sm:$0xff]
        %v465 = vld [vmem:[%s305 + $0xf8] sm:$0xff]
        %v466 = vld [vmem:[%s305 + $0x100] sm:$0xff]
        %v467 = vld [vmem:[%s305 + $0x108] sm:$0xff]
        %v468 = vld [vmem:[%s305 + $0x110] sm:$0xff]
        %v469 = vld [vmem:[%s305 + $0x118] sm:$0xff]
        %v470 = vld [vmem:[%s305 + $0x120] sm:$0xff]
        %v471 = vld [vmem:[%s305 + $0x128] sm:$0xff]
        %v472 = vld [vmem:[%s305 + $0x130] sm:$0xff]
        %v473 = vld [vmem:[%s305 + $0x138] sm:$0xff]
        %v474 = vld [vmem:[%s305 + $0x140] sm:$0xff]
        %v475 = vld [vmem:[%s305 + $0x148] sm:$0xff]
        %v476 = vld [vmem:[%s305 + $0x150] sm:$0xff]
        %v477 = vld [vmem:[%s305 + $0x158] sm:$0xff]
        %v478 = vld [vmem:[%s305 + $0x160] sm:$0xff]
        %v479 = vld [vmem:[%s305 + $0x168] sm:$0xff]
        %v480 = vld [vmem:[%s305 + $0x170] sm:$0xff]
        %v481 = vld [vmem:[%s305 + $0x178] sm:$0xff]
        %vm482 = vcmp.ne.f32.partialorder %v434, %v434
        %vm483 = vcmp.ne.f32.partialorder %v435, %v435
        %vm484 = vcmp.ne.f32.partialorder %v436, %v436
        %vm485 = vcmp.ne.f32.partialorder %v437, %v437
        %vm486 = vcmp.ne.f32.partialorder %v438, %v438
        %vm487 = vcmp.ne.f32.partialorder %v439, %v439
        %vm488 = vcmp.ne.f32.partialorder %v440, %v440
        %vm489 = vcmp.ne.f32.partialorder %v441, %v441
        %vm490 = vcmp.ne.f32.partialorder %v442, %v442
        %vm491 = vcmp.ne.f32.partialorder %v443, %v443
        %vm492 = vcmp.ne.f32.partialorder %v444, %v444
        %vm493 = vcmp.ne.f32.partialorder %v445, %v445
        %vm494 = vcmp.ne.f32.partialorder %v446, %v446
        %vm495 = vcmp.ne.f32.partialorder %v447, %v447
        %vm496 = vcmp.ne.f32.partialorder %v448, %v448
        %vm497 = vcmp.ne.f32.partialorder %v449, %v449
        %vm498 = vcmp.ne.f32.partialorder %v450, %v450
        %vm499 = vcmp.ne.f32.partialorder %v451, %v451
        %vm500 = vcmp.ne.f32.partialorder %v452, %v452
        %vm501 = vcmp.ne.f32.partialorder %v453, %v453
        %vm502 = vcmp.ne.f32.partialorder %v454, %v454
        %vm503 = vcmp.ne.f32.partialorder %v455, %v455
        %vm504 = vcmp.ne.f32.partialorder %v456, %v456
        %vm505 = vcmp.ne.f32.partialorder %v457, %v457
        %vm506 = vcmp.ne.f32.partialorder %v458, %v458
        %vm507 = vcmp.ne.f32.partialorder %v459, %v459
        %vm508 = vcmp.ne.f32.partialorder %v460, %v460
        %vm509 = vcmp.ne.f32.partialorder %v461, %v461
        %vm510 = vcmp.ne.f32.partialorder %v462, %v462
        %vm511 = vcmp.ne.f32.partialorder %v463, %v463
        %vm512 = vcmp.ne.f32.partialorder %v464, %v464
        %vm513 = vcmp.ne.f32.partialorder %v465, %v465
        %vm514 = vcmp.ne.f32.partialorder %v466, %v466
        %vm515 = vcmp.ne.f32.partialorder %v467, %v467
        %vm516 = vcmp.ne.f32.partialorder %v468, %v468
        %vm517 = vcmp.ne.f32.partialorder %v469, %v469
        %vm518 = vcmp.ne.f32.partialorder %v470, %v470
        %vm519 = vcmp.ne.f32.partialorder %v471, %v471
        %vm520 = vcmp.ne.f32.partialorder %v472, %v472
        %vm521 = vcmp.ne.f32.partialorder %v473, %v473
        %vm522 = vcmp.ne.f32.partialorder %v474, %v474
        %vm523 = vcmp.ne.f32.partialorder %v475, %v475
        %vm524 = vcmp.ne.f32.partialorder %v476, %v476
        %vm525 = vcmp.ne.f32.partialorder %v477, %v477
        %vm526 = vcmp.ne.f32.partialorder %v478, %v478
        %vm527 = vcmp.ne.f32.partialorder %v479, %v479
        %vm528 = vcmp.ne.f32.partialorder %v480, %v480
        %vm529 = vcmp.ne.f32.partialorder %v481, %v481
        %v530 = vsel %vm482, %v386, %v434
        %v531 = vsel %vm483, %v387, %v435
        %v532 = vsel %vm484, %v388, %v436
        %v533 = vsel %vm485, %v389, %v437
        %v534 = vsel %vm486, %v390, %v438
        %v535 = vsel %vm487, %v391, %v439
        %v536 = vsel %vm488, %v392, %v440
        %v537 = vsel %vm489, %v393, %v441
        %v538 = vsel %vm490, %v394, %v442
        %v539 = vsel %vm491, %v395, %v443
        %v540 = vsel %vm492, %v396, %v444
        %v541 = vsel %vm493, %v397, %v445
        %v542 = vsel %vm494, %v398, %v446
        %v543 = vsel %vm495, %v399, %v447
        %v544 = vsel %vm496, %v400, %v448
        %v545 = vsel %vm497, %v401, %v449
        %v546 = vsel %vm498, %v402, %v450
        %v547 = vsel %vm499, %v403, %v451
        %v548 = vsel %vm500, %v404, %v452
        %v549 = vsel %vm501, %v405, %v453
        %v550 = vsel %vm502, %v406, %v454
        %v551 = vsel %vm503, %v407, %v455
        %v552 = vsel %vm504, %v408, %v456
        %v553 = vsel %vm505, %v409, %v457
        %v554 = vsel %vm506, %v410, %v458
        %v555 = vsel %vm507, %v411, %v459
        %v556 = vsel %vm508, %v412, %v460
        %v557 = vsel %vm509, %v413, %v461
        %v558 = vsel %vm510, %v414, %v462
        %v559 = vsel %vm511, %v415, %v463
        %v560 = vsel %vm512, %v416, %v464
        %v561 = vsel %vm513, %v417, %v465
        %v562 = vsel %vm514, %v418, %v466
        %v563 = vsel %vm515, %v419, %v467
        %v564 = vsel %vm516, %v420, %v468
        %v565 = vsel %vm517, %v421, %v469
        %v566 = vsel %vm518, %v422, %v470
        %v567 = vsel %vm519, %v423, %v471
        %v568 = vsel %vm520, %v424, %v472
        %v569 = vsel %vm521, %v425, %v473
        %v570 = vsel %vm522, %v426, %v474
        %v571 = vsel %vm523, %v427, %v475
        %v572 = vsel %vm524, %v428, %v476
        %v573 = vsel %vm525, %v429, %v477
        %v574 = vsel %vm526, %v430, %v478
        %v575 = vsel %vm527, %v431, %v479
        %v576 = vsel %vm528, %v432, %v480
        %v577 = vsel %vm529, %v433, %v481
        %v578 = vsub.f32 %v386, %v530
        %v579 = vsub.f32 %v387, %v531
        %v580 = vsub.f32 %v388, %v532
        %v581 = vsub.f32 %v389, %v533
        %v582 = vsub.f32 %v390, %v534
        %v583 = vsub.f32 %v391, %v535
        %v584 = vsub.f32 %v392, %v536
        %v585 = vsub.f32 %v393, %v537
        %v586 = vsub.f32 %v394, %v538
        %v587 = vsub.f32 %v395, %v539
        %v588 = vsub.f32 %v396, %v540
        %v589 = vsub.f32 %v397, %v541
        %v590 = vsub.f32 %v398, %v542
        %v591 = vsub.f32 %v399, %v543
        %v592 = vsub.f32 %v400, %v544
        %v593 = vsub.f32 %v401, %v545
        %v594 = vsub.f32 %v402, %v546
        %v595 = vsub.f32 %v403, %v547
        %v596 = vsub.f32 %v404, %v548
        %v597 = vsub.f32 %v405, %v549
        %v598 = vsub.f32 %v406, %v550
        %v599 = vsub.f32 %v407, %v551
        %v600 = vsub.f32 %v408, %v552
        %v601 = vsub.f32 %v409, %v553
        %v602 = vsub.f32 %v410, %v554
        %v603 = vsub.f32 %v411, %v555
        %v604 = vsub.f32 %v412, %v556
        %v605 = vsub.f32 %v413, %v557
        %v606 = vsub.f32 %v414, %v558
        %v607 = vsub.f32 %v415, %v559
        %v608 = vsub.f32 %v416, %v560
        %v609 = vsub.f32 %v417, %v561
        %v610 = vsub.f32 %v418, %v562
        %v611 = vsub.f32 %v419, %v563
        %v612 = vsub.f32 %v420, %v564
        %v613 = vsub.f32 %v421, %v565
        %v614 = vsub.f32 %v422, %v566
        %v615 = vsub.f32 %v423, %v567
        %v616 = vsub.f32 %v424, %v568
        %v617 = vsub.f32 %v425, %v569
        %v618 = vsub.f32 %v426, %v570
        %v619 = vsub.f32 %v427, %v571
        %v620 = vsub.f32 %v428, %v572
        %v621 = vsub.f32 %v429, %v573
        %v622 = vsub.f32 %v430, %v574
        %v623 = vsub.f32 %v431, %v575
        %v624 = vsub.f32 %v432, %v576
        %v625 = vsub.f32 %v433, %v577
        %v626 = vld [vmem:[#allocation7] sm:$0x3]
        %v628 = vlaneseq
        %v629 = vshrl.u32 %v628, 7
        %v630 = vsub.s32 0, %v629
        %v631 = vrot.slane %v626, %v630
        %v632 = vlaneseq
        %v633 = vshrl.u32 %v632, 7
        %v634 = vsub.s32 1, %v633
        %v635 = vrot.slane %v626, %v634
        %v638 = vmul.f32 %v578, %v631
        %v639 = vmul.f32 %v579, %v635
        %v640 = vmul.f32 %v580, %v631
        %v641 = vmul.f32 %v581, %v635
        %v642 = vmul.f32 %v582, %v631
        %v643 = vmul.f32 %v583, %v635
        %v644 = vmul.f32 %v584, %v631
        %v645 = vmul.f32 %v585, %v635
        %v646 = vmul.f32 %v586, %v631
        %v647 = vmul.f32 %v587, %v635
        %v648 = vmul.f32 %v588, %v631
        %v649 = vmul.f32 %v589, %v635
        %v650 = vmul.f32 %v590, %v631
        %v651 = vmul.f32 %v591, %v635
        %v652 = vmul.f32 %v592, %v631
        %v653 = vmul.f32 %v593, %v635
        %v654 = vmul.f32 %v594, %v631
        %v655 = vmul.f32 %v595, %v635
        %v656 = vmul.f32 %v596, %v631
        %v657 = vmul.f32 %v597, %v635
        %v658 = vmul.f32 %v598, %v631
        %v659 = vmul.f32 %v599, %v635
        %v660 = vmul.f32 %v600, %v631
        %v661 = vmul.f32 %v601, %v635
        %v662 = vmul.f32 %v602, %v631
        %v663 = vmul.f32 %v603, %v635
        %v664 = vmul.f32 %v604, %v631
        %v665 = vmul.f32 %v605, %v635
        %v666 = vmul.f32 %v606, %v631
        %v667 = vmul.f32 %v607, %v635
        %v668 = vmul.f32 %v608, %v631
        %v669 = vmul.f32 %v609, %v635
        %v670 = vmul.f32 %v610, %v631
        %v671 = vmul.f32 %v611, %v635
        %v672 = vmul.f32 %v612, %v631
        %v673 = vmul.f32 %v613, %v635
        %v674 = vmul.f32 %v614, %v631
        %v675 = vmul.f32 %v615, %v635
        %v676 = vmul.f32 %v616, %v631
        %v677 = vmul.f32 %v617, %v635
        %v678 = vmul.f32 %v618, %v631
        %v679 = vmul.f32 %v619, %v635
        %v680 = vmul.f32 %v620, %v631
        %v681 = vmul.f32 %v621, %v635
        %v682 = vmul.f32 %v622, %v631
        %v683 = vmul.f32 %v623, %v635
        %v684 = vmul.f32 %v624, %v631
        %v685 = vmul.f32 %v625, %v635
        %v686 = vand.u32 2147483647, %v638
        %v687 = vand.u32 2147483647, %v639
        %v688 = vand.u32 2147483647, %v640
        %v689 = vand.u32 2147483647, %v641
        %v690 = vand.u32 2147483647, %v642
        %v691 = vand.u32 2147483647, %v643
        %v692 = vand.u32 2147483647, %v644
        %v693 = vand.u32 2147483647, %v645
        %v694 = vand.u32 2147483647, %v646
        %v695 = vand.u32 2147483647, %v647
        %v696 = vand.u32 2147483647, %v648
        %v697 = vand.u32 2147483647, %v649
        %v698 = vand.u32 2147483647, %v650
        %v699 = vand.u32 2147483647, %v651
        %v700 = vand.u32 2147483647, %v652
        %v701 = vand.u32 2147483647, %v653
        %v702 = vand.u32 2147483647, %v654
        %v703 = vand.u32 2147483647, %v655
        %v704 = vand.u32 2147483647, %v656
        %v705 = vand.u32 2147483647, %v657
        %v706 = vand.u32 2147483647, %v658
        %v707 = vand.u32 2147483647, %v659
        %v708 = vand.u32 2147483647, %v660
        %v709 = vand.u32 2147483647, %v661
        %v710 = vand.u32 2147483647, %v662
        %v711 = vand.u32 2147483647, %v663
        %v712 = vand.u32 2147483647, %v664
        %v713 = vand.u32 2147483647, %v665
        %v714 = vand.u32 2147483647, %v666
        %v715 = vand.u32 2147483647, %v667
        %v716 = vand.u32 2147483647, %v668
        %v717 = vand.u32 2147483647, %v669
        %v718 = vand.u32 2147483647, %v670
        %v719 = vand.u32 2147483647, %v671
        %v720 = vand.u32 2147483647, %v672
        %v721 = vand.u32 2147483647, %v673
        %v722 = vand.u32 2147483647, %v674
        %v723 = vand.u32 2147483647, %v675
        %v724 = vand.u32 2147483647, %v676
        %v725 = vand.u32 2147483647, %v677
        %v726 = vand.u32 2147483647, %v678
        %v727 = vand.u32 2147483647, %v679
        %v728 = vand.u32 2147483647, %v680
        %v729 = vand.u32 2147483647, %v681
        %v730 = vand.u32 2147483647, %v682
        %v731 = vand.u32 2147483647, %v683
        %v732 = vand.u32 2147483647, %v684
        %v733 = vand.u32 2147483647, %v685
        %vm734 = vcmp.lt.f32.partialorder %v686, 0.11111111
        %vm735 = vcmp.lt.f32.partialorder %v687, 0.11111111
        %vm736 = vcmp.lt.f32.partialorder %v688, 0.11111111
        %vm737 = vcmp.lt.f32.partialorder %v689, 0.11111111
        %vm738 = vcmp.lt.f32.partialorder %v690, 0.11111111
        %vm739 = vcmp.lt.f32.partialorder %v691, 0.11111111
        %vm740 = vcmp.lt.f32.partialorder %v692, 0.11111111
        %vm741 = vcmp.lt.f32.partialorder %v693, 0.11111111
        %vm742 = vcmp.lt.f32.partialorder %v694, 0.11111111
        %vm743 = vcmp.lt.f32.partialorder %v695, 0.11111111
        %vm744 = vcmp.lt.f32.partialorder %v696, 0.11111111
        %vm745 = vcmp.lt.f32.partialorder %v697, 0.11111111
        %vm746 = vcmp.lt.f32.partialorder %v698, 0.11111111
        %vm747 = vcmp.lt.f32.partialorder %v699, 0.11111111
        %vm748 = vcmp.lt.f32.partialorder %v700, 0.11111111
        %vm749 = vcmp.lt.f32.partialorder %v701, 0.11111111
        %vm750 = vcmp.lt.f32.partialorder %v702, 0.11111111
        %vm751 = vcmp.lt.f32.partialorder %v703, 0.11111111
        %vm752 = vcmp.lt.f32.partialorder %v704, 0.11111111
        %vm753 = vcmp.lt.f32.partialorder %v705, 0.11111111
        %vm754 = vcmp.lt.f32.partialorder %v706, 0.11111111
        %vm755 = vcmp.lt.f32.partialorder %v707, 0.11111111
        %vm756 = vcmp.lt.f32.partialorder %v708, 0.11111111
        %vm757 = vcmp.lt.f32.partialorder %v709, 0.11111111
        %vm758 = vcmp.lt.f32.partialorder %v710, 0.11111111
        %vm759 = vcmp.lt.f32.partialorder %v711, 0.11111111
        %vm760 = vcmp.lt.f32.partialorder %v712, 0.11111111
        %vm761 = vcmp.lt.f32.partialorder %v713, 0.11111111
        %vm762 = vcmp.lt.f32.partialorder %v714, 0.11111111
        %vm763 = vcmp.lt.f32.partialorder %v715, 0.11111111
        %vm764 = vcmp.lt.f32.partialorder %v716, 0.11111111
        %vm765 = vcmp.lt.f32.partialorder %v717, 0.11111111
        %vm766 = vcmp.lt.f32.partialorder %v718, 0.11111111
        %vm767 = vcmp.lt.f32.partialorder %v719, 0.11111111
        %vm768 = vcmp.lt.f32.partialorder %v720, 0.11111111
        %vm769 = vcmp.lt.f32.partialorder %v721, 0.11111111
        %vm770 = vcmp.lt.f32.partialorder %v722, 0.11111111
        %vm771 = vcmp.lt.f32.partialorder %v723, 0.11111111
        %vm772 = vcmp.lt.f32.partialorder %v724, 0.11111111
        %vm773 = vcmp.lt.f32.partialorder %v725, 0.11111111
        %vm774 = vcmp.lt.f32.partialorder %v726, 0.11111111
        %vm775 = vcmp.lt.f32.partialorder %v727, 0.11111111
        %vm776 = vcmp.lt.f32.partialorder %v728, 0.11111111
        %vm777 = vcmp.lt.f32.partialorder %v729, 0.11111111
        %vm778 = vcmp.lt.f32.partialorder %v730, 0.11111111
        %vm779 = vcmp.lt.f32.partialorder %v731, 0.11111111
        %vm780 = vcmp.lt.f32.partialorder %v732, 0.11111111
        %vm781 = vcmp.lt.f32.partialorder %v733, 0.11111111
        %v782 = vmul.f32 %v686, 4.5
        %v783 = vmul.f32 %v687, 4.5
        %v784 = vmul.f32 %v688, 4.5
        %v785 = vmul.f32 %v689, 4.5
        %v786 = vmul.f32 %v690, 4.5
        %v787 = vmul.f32 %v691, 4.5
        %v788 = vmul.f32 %v692, 4.5
        %v789 = vmul.f32 %v693, 4.5
        %v790 = vmul.f32 %v694, 4.5
        %v791 = vmul.f32 %v695, 4.5
        %v792 = vmul.f32 %v696, 4.5
        %v793 = vmul.f32 %v697, 4.5
        %v794 = vmul.f32 %v698, 4.5
        %v795 = vmul.f32 %v699, 4.5
        %v796 = vmul.f32 %v700, 4.5
        %v797 = vmul.f32 %v701, 4.5
        %v798 = vmul.f32 %v702, 4.5
        %v799 = vmul.f32 %v703, 4.5
        %v800 = vmul.f32 %v704, 4.5
        %v801 = vmul.f32 %v705, 4.5
        %v802 = vmul.f32 %v706, 4.5
        %v803 = vmul.f32 %v707, 4.5
        %v804 = vmul.f32 %v708, 4.5
        %v805 = vmul.f32 %v709, 4.5
        %v806 = vmul.f32 %v710, 4.5
        %v807 = vmul.f32 %v711, 4.5
        %v808 = vmul.f32 %v712, 4.5
        %v809 = vmul.f32 %v713, 4.5
        %v810 = vmul.f32 %v714, 4.5
        %v811 = vmul.f32 %v715, 4.5
        %v812 = vmul.f32 %v716, 4.5
        %v813 = vmul.f32 %v717, 4.5
        %v814 = vmul.f32 %v718, 4.5
        %v815 = vmul.f32 %v719, 4.5
        %v816 = vmul.f32 %v720, 4.5
        %v817 = vmul.f32 %v721, 4.5
        %v818 = vmul.f32 %v722, 4.5
        %v819 = vmul.f32 %v723, 4.5
        %v820 = vmul.f32 %v724, 4.5
        %v821 = vmul.f32 %v725, 4.5
        %v822 = vmul.f32 %v726, 4.5
        %v823 = vmul.f32 %v727, 4.5
        %v824 = vmul.f32 %v728, 4.5
        %v825 = vmul.f32 %v729, 4.5
        %v826 = vmul.f32 %v730, 4.5
        %v827 = vmul.f32 %v731, 4.5
        %v828 = vmul.f32 %v732, 4.5
        %v829 = vmul.f32 %v733, 4.5
        %v830 = vmul.f32 %v782, %v686
        %v831 = vmul.f32 %v783, %v687
        %v832 = vmul.f32 %v784, %v688
        %v833 = vmul.f32 %v785, %v689
        %v834 = vmul.f32 %v786, %v690
        %v835 = vmul.f32 %v787, %v691
        %v836 = vmul.f32 %v788, %v692
        %v837 = vmul.f32 %v789, %v693
        %v838 = vmul.f32 %v790, %v694
        %v839 = vmul.f32 %v791, %v695
        %v840 = vmul.f32 %v792, %v696
        %v841 = vmul.f32 %v793, %v697
        %v842 = vmul.f32 %v794, %v698
        %v843 = vmul.f32 %v795, %v699
        %v844 = vmul.f32 %v796, %v700
        %v845 = vmul.f32 %v797, %v701
        %v846 = vmul.f32 %v798, %v702
        %v847 = vmul.f32 %v799, %v703
        %v848 = vmul.f32 %v800, %v704
        %v849 = vmul.f32 %v801, %v705
        %v850 = vmul.f32 %v802, %v706
        %v851 = vmul.f32 %v803, %v707
        %v852 = vmul.f32 %v804, %v708
        %v853 = vmul.f32 %v805, %v709
        %v854 = vmul.f32 %v806, %v710
        %v855 = vmul.f32 %v807, %v711
        %v856 = vmul.f32 %v808, %v712
        %v857 = vmul.f32 %v809, %v713
        %v858 = vmul.f32 %v810, %v714
        %v859 = vmul.f32 %v811, %v715
        %v860 = vmul.f32 %v812, %v716
        %v861 = vmul.f32 %v813, %v717
        %v862 = vmul.f32 %v814, %v718
        %v863 = vmul.f32 %v815, %v719
        %v864 = vmul.f32 %v816, %v720
        %v865 = vmul.f32 %v817, %v721
        %v866 = vmul.f32 %v818, %v722
        %v867 = vmul.f32 %v819, %v723
        %v868 = vmul.f32 %v820, %v724
        %v869 = vmul.f32 %v821, %v725
        %v870 = vmul.f32 %v822, %v726
        %v871 = vmul.f32 %v823, %v727
        %v872 = vmul.f32 %v824, %v728
        %v873 = vmul.f32 %v825, %v729
        %v874 = vmul.f32 %v826, %v730
        %v875 = vmul.f32 %v827, %v731
        %v876 = vmul.f32 %v828, %v732
        %v877 = vmul.f32 %v829, %v733
        %v878 = vsub.f32 %v686, 0.055555556
        %v879 = vsub.f32 %v687, 0.055555556
        %v880 = vsub.f32 %v688, 0.055555556
        %v881 = vsub.f32 %v689, 0.055555556
        %v882 = vsub.f32 %v690, 0.055555556
        %v883 = vsub.f32 %v691, 0.055555556
        %v884 = vsub.f32 %v692, 0.055555556
        %v885 = vsub.f32 %v693, 0.055555556
        %v886 = vsub.f32 %v694, 0.055555556
        %v887 = vsub.f32 %v695, 0.055555556
        %v888 = vsub.f32 %v696, 0.055555556
        %v889 = vsub.f32 %v697, 0.055555556
        %v890 = vsub.f32 %v698, 0.055555556
        %v891 = vsub.f32 %v699, 0.055555556
        %v892 = vsub.f32 %v700, 0.055555556
        %v893 = vsub.f32 %v701, 0.055555556
        %v894 = vsub.f32 %v702, 0.055555556
        %v895 = vsub.f32 %v703, 0.055555556
        %v896 = vsub.f32 %v704, 0.055555556
        %v897 = vsub.f32 %v705, 0.055555556
        %v898 = vsub.f32 %v706, 0.055555556
        %v899 = vsub.f32 %v707, 0.055555556
        %v900 = vsub.f32 %v708, 0.055555556
        %v901 = vsub.f32 %v709, 0.055555556
        %v902 = vsub.f32 %v710, 0.055555556
        %v903 = vsub.f32 %v711, 0.055555556
        %v904 = vsub.f32 %v712, 0.055555556
        %v905 = vsub.f32 %v713, 0.055555556
        %v906 = vsub.f32 %v714, 0.055555556
        %v907 = vsub.f32 %v715, 0.055555556
        %v908 = vsub.f32 %v716, 0.055555556
        %v909 = vsub.f32 %v717, 0.055555556
        %v910 = vsub.f32 %v718, 0.055555556
        %v911 = vsub.f32 %v719, 0.055555556
        %v912 = vsub.f32 %v720, 0.055555556
        %v913 = vsub.f32 %v721, 0.055555556
        %v914 = vsub.f32 %v722, 0.055555556
        %v915 = vsub.f32 %v723, 0.055555556
        %v916 = vsub.f32 %v724, 0.055555556
        %v917 = vsub.f32 %v725, 0.055555556
        %v918 = vsub.f32 %v726, 0.055555556
        %v919 = vsub.f32 %v727, 0.055555556
        %v920 = vsub.f32 %v728, 0.055555556
        %v921 = vsub.f32 %v729, 0.055555556
        %v922 = vsub.f32 %v730, 0.055555556
        %v923 = vsub.f32 %v731, 0.055555556
        %v924 = vsub.f32 %v732, 0.055555556
        %v925 = vsub.f32 %v733, 0.055555556
        %v926 = vsel %vm734, %v830, %v878
        %v927 = vsel %vm735, %v831, %v879
        %v928 = vsel %vm736, %v832, %v880
        %v929 = vsel %vm737, %v833, %v881
        %v930 = vsel %vm738, %v834, %v882
        %v931 = vsel %vm739, %v835, %v883
        %v932 = vsel %vm740, %v836, %v884
        %v933 = vsel %vm741, %v837, %v885
        %v934 = vsel %vm742, %v838, %v886
        %v935 = vsel %vm743, %v839, %v887
        %v936 = vsel %vm744, %v840, %v888
        %v937 = vsel %vm745, %v841, %v889
        %v938 = vsel %vm746, %v842, %v890
        %v939 = vsel %vm747, %v843, %v891
        %v940 = vsel %vm748, %v844, %v892
        %v941 = vsel %vm749, %v845, %v893
        %v942 = vsel %vm750, %v846, %v894
        %v943 = vsel %vm751, %v847, %v895
        %v944 = vsel %vm752, %v848, %v896
        %v945 = vsel %vm753, %v849, %v897
        %v946 = vsel %vm754, %v850, %v898
        %v947 = vsel %vm755, %v851, %v899
        %v948 = vsel %vm756, %v852, %v900
        %v949 = vsel %vm757, %v853, %v901
        %v950 = vsel %vm758, %v854, %v902
        %v951 = vsel %vm759, %v855, %v903
        %v952 = vsel %vm760, %v856, %v904
        %v953 = vsel %vm761, %v857, %v905
        %v954 = vsel %vm762, %v858, %v906
        %v955 = vsel %vm763, %v859, %v907
        %v956 = vsel %vm764, %v860, %v908
        %v957 = vsel %vm765, %v861, %v909
        %v958 = vsel %vm766, %v862, %v910
        %v959 = vsel %vm767, %v863, %v911
        %v960 = vsel %vm768, %v864, %v912
        %v961 = vsel %vm769, %v865, %v913
        %v962 = vsel %vm770, %v866, %v914
        %v963 = vsel %vm771, %v867, %v915
        %v964 = vsel %vm772, %v868, %v916
        %v965 = vsel %vm773, %v869, %v917
        %v966 = vsel %vm774, %v870, %v918
        %v967 = vsel %vm775, %v871, %v919
        %v968 = vsel %vm776, %v872, %v920
        %v969 = vsel %vm777, %v873, %v921
        %v970 = vsel %vm778, %v874, %v922
        %v971 = vsel %vm779, %v875, %v923
        %v972 = vsel %vm780, %v876, %v924
        %v973 = vsel %vm781, %v877, %v925
        %v974 = vld [vmem:[%s374] sm:$0xff]
        %v975 = vld [vmem:[%s374 + $0x8] sm:$0xff]
        %v976 = vld [vmem:[%s374 + $0x10] sm:$0xff]
        %v977 = vld [vmem:[%s374 + $0x18] sm:$0xff]
        %v978 = vld [vmem:[%s374 + $0x20] sm:$0xff]
        %v979 = vld [vmem:[%s374 + $0x28] sm:$0xff]
        %v980 = vld [vmem:[%s374 + $0x30] sm:$0xff]
        %v981 = vld [vmem:[%s374 + $0x38] sm:$0xff]
        %v982 = vld [vmem:[%s374 + $0x40] sm:$0xff]
        %v983 = vld [vmem:[%s374 + $0x48] sm:$0xff]
        %v984 = vld [vmem:[%s374 + $0x50] sm:$0xff]
        %v985 = vld [vmem:[%s374 + $0x58] sm:$0xff]
        %v986 = vld [vmem:[%s374 + $0x60] sm:$0xff]
        %v987 = vld [vmem:[%s374 + $0x68] sm:$0xff]
        %v988 = vld [vmem:[%s374 + $0x70] sm:$0xff]
        %v989 = vld [vmem:[%s374 + $0x78] sm:$0xff]
        %v990 = vld [vmem:[%s374 + $0x80] sm:$0xff]
        %v991 = vld [vmem:[%s374 + $0x88] sm:$0xff]
        %v992 = vld [vmem:[%s374 + $0x90] sm:$0xff]
        %v993 = vld [vmem:[%s374 + $0x98] sm:$0xff]
        %v994 = vld [vmem:[%s374 + $0xa0] sm:$0xff]
        %v995 = vld [vmem:[%s374 + $0xa8] sm:$0xff]
        %v996 = vld [vmem:[%s374 + $0xb0] sm:$0xff]
        %v997 = vld [vmem:[%s374 + $0xb8] sm:$0xff]
        %v998 = vld [vmem:[#allocation8] sm:$0xff]
        %v999 = vld [vmem:[#allocation8 + $0x8] sm:$0xff]
        %v1000 = vld [vmem:[#allocation8 + $0x10] sm:$0xff]
        %v1001 = vld [vmem:[#allocation8 + $0x18] sm:$0xff]
        %v1002 = vld [vmem:[#allocation8 + $0x20] sm:$0xff]
        %v1003 = vld [vmem:[#allocation8 + $0x28] sm:$0xff]
        %v1004 = vld [vmem:[#allocation8 + $0x30] sm:$0xff]
        %v1005 = vld [vmem:[#allocation8 + $0x38] sm:$0xff]
        %vm1006 = vcmask 261120
        %v1008 = vsel %vm1006, %v974, 0
        %v1011 = vsel %vm1006, %v975, 0
        %v1014 = vsel %vm1006, %v976, 0
        %v1017 = vsel %vm1006, %v977, 0
        %v1020 = vsel %vm1006, %v978, 0
        %v1023 = vsel %vm1006, %v979, 0
        %v1026 = vsel %vm1006, %v980, 0
        %v1029 = vsel %vm1006, %v981, 0
        %v1032 = vsel %vm1006, %v982, 0
        %v1035 = vsel %vm1006, %v983, 0
        %v1038 = vsel %vm1006, %v984, 0
        %v1041 = vsel %vm1006, %v985, 0
        %v1044 = vsel %vm1006, %v986, 0
        %v1047 = vsel %vm1006, %v987, 0
        %v1050 = vsel %vm1006, %v988, 0
        %v1053 = vsel %vm1006, %v989, 0
        %v1056 = vsel %vm1006, %v990, 0
        %v1059 = vsel %vm1006, %v991, 0
        %v1062 = vsel %vm1006, %v992, 0
        %v1065 = vsel %vm1006, %v993, 0
        %v1068 = vsel %vm1006, %v994, 0
        %v1071 = vsel %vm1006, %v995, 0
        %v1074 = vsel %vm1006, %v996, 0
        %v1077 = vsel %vm1006, %v997, 0
        %v1079 = vand.u32 %v999, 4294901760
        %1080 = vmatprep.subr.mxu0 %v1079
        %v1081 = vand.u32 %v998, 4294901760
        %1082 = vmatpush1.msra.mxu0 %v1081
        %v1083 = vand.u32 %v1001, 4294901760
        %1084 = vmatprep.subr.mxu0 %v1083
        %v1085 = vand.u32 %v1000, 4294901760
        %1086 = vmatpush1.msra.mxu0 %v1085
        %v1087 = vand.u32 %v1003, 4294901760
        %1088 = vmatprep.subr.mxu0 %v1087
        %v1089 = vand.u32 %v1002, 4294901760
        %1090 = vmatpush1.msra.mxu0 %v1089
        %v1091 = vand.u32 %v1005, 4294901760
        %1092 = vmatprep.subr.mxu0 %v1091
        %v1093 = vand.u32 %v1004, 4294901760
        %1094 = vmatpush1.msra.mxu0 %v1093
        %1095 = vmatprep.subr.mxu0 0.0
        %1096 = vmatpush1.msra.mxu0 0.0
        %1097 = vmatprep.subr.mxu0 0.0
        %1098 = vmatpush1.msra.mxu0 0.0
        %1099 = vmatprep.subr.mxu0 0.0
        %1100 = vmatpush1.msra.mxu0 0.0
        %1101 = vmatprep.subr.mxu0 0.0
        %1102 = vmatpush1.msra.mxu0 0.0
        %1103 = vmatprep.subr.mxu0 0.0
        %1104 = vmatpush1.msra.mxu0 0.0
        %1105 = vmatprep.subr.mxu0 0.0
        %1106 = vmatpush1.msra.mxu0 0.0
        %1107 = vmatprep.subr.mxu0 0.0
        %1108 = vmatpush1.msra.mxu0 0.0
        %1109 = vmatprep.subr.mxu0 0.0
        %1110 = vmatpush1.msra.mxu0 0.0
        %1111 = vmatprep.subr.mxu0 0.0
        %1112 = vmatpush1.msra.mxu0 0.0
        %1113 = vmatprep.subr.mxu0 0.0
        %1114 = vmatpush1.msra.mxu0 0.0
        %1115 = vmatprep.subr.mxu0 0.0
        %1116 = vmatpush1.msra.mxu0 0.0
        %1117 = vmatprep.subr.mxu0 0.0
        %1118 = vmatpush1.msra.mxu0 0.0
        %1119 = vmatprep.subr.mxu0 0.0
        %1120 = vmatpush1.msra.mxu0 0.0
        %1121 = vmatprep.subr.mxu0 0.0
        %1122 = vmatpush1.msra.mxu0 0.0
        %1123 = vmatprep.subr.mxu0 0.0
        %1124 = vmatpush1.msra.mxu0 0.0
        %1125 = vmatprep.subr.mxu0 0.0
        %1126 = vmatpush1.msra.mxu0 0.0
        %1127 = vmatprep.subr.mxu0 0.0
        %1128 = vmatpush1.msra.mxu0 0.0
        %1129 = vmatprep.subr.mxu0 0.0
        %1130 = vmatpush1.msra.mxu0 0.0
        %1131 = vmatprep.subr.mxu0 0.0
        %1132 = vmatpush1.msra.mxu0 0.0
        %1133 = vmatprep.subr.mxu0 0.0
        %1134 = vmatpush1.msra.mxu0 0.0
        %1135 = vmatprep.subr.mxu0 0.0
        %1136 = vmatpush1.msra.mxu0 0.0
        %1137 = vmatprep.subr.mxu0 0.0
        %1138 = vmatpush1.msra.mxu0 0.0
        %1139 = vmatprep.subr.mxu0 0.0
        %1140 = vmatpush1.msra.mxu0 0.0
        %1141 = vmatprep.subr.mxu0 0.0
        %1142 = vmatpush1.msra.mxu0 0.0
        %1143 = vmatprep.subr.mxu0 0.0
        %1144 = vmatpush1.msra.mxu0 0.0
        %1145 = vmatprep.subr.mxu0 0.0
        %1146 = vmatpush1.msra.mxu0 0.0
        %1147 = vmatprep.subr.mxu0 0.0
        %1148 = vmatpush1.msra.mxu0 0.0
        %1149 = vmatprep.subr.mxu0 0.0
        %1150 = vmatpush1.msra.mxu0 0.0
        %1151 = vmatprep.mubr.f32.mxu0 0.0
        %v1152 = vand.u32 %v1008, 4294901760
        %v1153 = vsub.f32 %v1008, %v1152
        %v1154 = vand.u32 %v1153, 4294901760
        %v1155 = vsub.f32 %v1153, %v1154
        %v1156 = vand.u32 %v1155, 4294901760
        %1157 = vmatmul.mubr.f32.gmra.mrb[0].mxu0 %v1156
        %v1158 = vpop.f32.mrb[0].mxu0
        %v1159 = vadd.f32 0.0, %v1158
        %v1160 = vpop.f32.mrb[0].mxu0
        %v1161 = vadd.f32 0.0, %v1160
        %1162 = vmatprep.mubr.f32.mxu0 0.0
        %v1163 = vand.u32 %v1011, 4294901760
        %v1164 = vsub.f32 %v1011, %v1163
        %v1165 = vand.u32 %v1164, 4294901760
        %v1166 = vsub.f32 %v1164, %v1165
        %v1167 = vand.u32 %v1166, 4294901760
        %1168 = vmatmul.mubr.f32.gmra.mrb[0].mxu0 %v1167
        %v1169 = vpop.f32.mrb[0].mxu0
        %v1170 = vadd.f32 0.0, %v1169
        %v1171 = vpop.f32.mrb[0].mxu0
        %v1172 = vadd.f32 0.0, %v1171
        %1173 = vmatprep.mubr.f32.mxu0 0.0
        %v1174 = vand.u32 %v1014, 4294901760
        %v1175 = vsub.f32 %v1014, %v1174
        %v1176 = vand.u32 %v1175, 4294901760
        %v1177 = vsub.f32 %v1175, %v1176
        %v1178 = vand.u32 %v1177, 4294901760
        %1179 = vmatmul.mubr.f32.gmra.mrb[0].mxu0 %v1178
        %v1180 = vpop.f32.mrb[0].mxu0
        %v1181 = vadd.f32 0.0, %v1180
        %v1182 = vpop.f32.mrb[0].mxu0
        %v1183 = vadd.f32 0.0, %v1182
        %1184 = vmatprep.mubr.f32.mxu0 0.0
        %v1185 = vand.u32 %v1017, 4294901760
        %v1186 = vsub.f32 %v1017, %v1185
        %v1187 = vand.u32 %v1186, 4294901760
        %v1188 = vsub.f32 %v1186, %v1187
        %v1189 = vand.u32 %v1188, 4294901760
        %1190 = vmatmul.mubr.f32.gmra.mrb[0].mxu0 %v1189
        %v1191 = vpop.f32.mrb[0].mxu0
        %v1192 = vadd.f32 0.0, %v1191
        %v1193 = vpop.f32.mrb[0].mxu0
        %v1194 = vadd.f32 0.0, %v1193
        %1195 = vmatprep.mubr.f32.mxu0 0.0
        %v1196 = vand.u32 %v1020, 4294901760
        %v1197 = vsub.f32 %v1020, %v1196
        %v1198 = vand.u32 %v1197, 4294901760
        %v1199 = vsub.f32 %v1197, %v1198
        %v1200 = vand.u32 %v1199, 4294901760
        %1201 = vmatmul.mubr.f32.gmra.mrb[0].mxu0 %v1200
        %v1202 = vpop.f32.mrb[0].mxu0
        %v1203 = vadd.f32 0.0, %v1202
        %v1204 = vpop.f32.mrb[0].mxu0
        %v1205 = vadd.f32 0.0, %v1204
        %1206 = vmatprep.mubr.f32.mxu0 0.0
        %v1207 = vand.u32 %v1023, 4294901760
        %v1208 = vsub.f32 %v1023, %v1207
        %v1209 = vand.u32 %v1208, 4294901760
        %v1210 = vsub.f32 %v1208, %v1209
        %v1211 = vand.u32 %v1210, 4294901760
        %1212 = vmatmul.mubr.f32.gmra.mrb[0].mxu0 %v1211
        %v1213 = vpop.f32.mrb[0].mxu0
        %v1214 = vadd.f32 0.0, %v1213
        %v1215 = vpop.f32.mrb[0].mxu0
        %v1216 = vadd.f32 0.0, %v1215
        %1217 = vmatprep.mubr.f32.mxu0 0.0
        %v1218 = vand.u32 %v1026, 4294901760
        %v1219 = vsub.f32 %v1026, %v1218
        %v1220 = vand.u32 %v1219, 4294901760
        %v1221 = vsub.f32 %v1219, %v1220
        %v1222 = vand.u32 %v1221, 4294901760
        %1223 = vmatmul.mubr.f32.gmra.mrb[0].mxu0 %v1222
        %v1224 = vpop.f32.mrb[0].mxu0
        %v1225 = vadd.f32 0.0, %v1224
        %v1226 = vpop.f32.mrb[0].mxu0
        %v1227 = vadd.f32 0.0, %v1226
        %1228 = vmatprep.mubr.f32.mxu0 0.0
        %v1229 = vand.u32 %v1029, 4294901760
        %v1230 = vsub.f32 %v1029, %v1229
        %v1231 = vand.u32 %v1230, 4294901760
        %v1232 = vsub.f32 %v1230, %v1231
        %v1233 = vand.u32 %v1232, 4294901760
        %1234 = vmatmul.mubr.f32.gmra.mrb[0].mxu0 %v1233
        %v1235 = vpop.f32.mrb[0].mxu0
        %v1236 = vadd.f32 0.0, %v1235
        %v1237 = vpop.f32.mrb[0].mxu0
        %v1238 = vadd.f32 0.0, %v1237
        %1239 = vmatprep.mubr.f32.mxu0 0.0
        %v1240 = vand.u32 %v1032, 4294901760
        %v1241 = vsub.f32 %v1032, %v1240
        %v1242 = vand.u32 %v1241, 4294901760
        %v1243 = vsub.f32 %v1241, %v1242
        %v1244 = vand.u32 %v1243, 4294901760
        %1245 = vmatmul.mubr.f32.gmra.mrb[0].mxu0 %v1244
        %v1246 = vpop.f32.mrb[0].mxu0
        %v1247 = vadd.f32 0.0, %v1246
        %v1248 = vpop.f32.mrb[0].mxu0
        %v1249 = vadd.f32 0.0, %v1248
        %1250 = vmatprep.mubr.f32.mxu0 0.0
        %v1251 = vand.u32 %v1035, 4294901760
        %v1252 = vsub.f32 %v1035, %v1251
        %v1253 = vand.u32 %v1252, 4294901760
        %v1254 = vsub.f32 %v1252, %v1253
        %v1255 = vand.u32 %v1254, 4294901760
        %1256 = vmatmul.mubr.f32.gmra.mrb[0].mxu0 %v1255
        %v1257 = vpop.f32.mrb[0].mxu0
        %v1258 = vadd.f32 0.0, %v1257
        %v1259 = vpop.f32.mrb[0].mxu0
        %v1260 = vadd.f32 0.0, %v1259
        %1261 = vmatprep.mubr.f32.mxu0 0.0
        %v1262 = vand.u32 %v1038, 4294901760
        %v1263 = vsub.f32 %v1038, %v1262
        %v1264 = vand.u32 %v1263, 4294901760
        %v1265 = vsub.f32 %v1263, %v1264
        %v1266 = vand.u32 %v1265, 4294901760
        %1267 = vmatmul.mubr.f32.gmra.mrb[0].mxu0 %v1266
        %v1268 = vpop.f32.mrb[0].mxu0
        %v1269 = vadd.f32 0.0, %v1268
        %v1270 = vpop.f32.mrb[0].mxu0
        %v1271 = vadd.f32 0.0, %v1270
        %1272 = vmatprep.mubr.f32.mxu0 0.0
        %v1273 = vand.u32 %v1041, 4294901760
        %v1274 = vsub.f32 %v1041, %v1273
        %v1275 = vand.u32 %v1274, 4294901760
        %v1276 = vsub.f32 %v1274, %v1275
        %v1277 = vand.u32 %v1276, 4294901760
        %1278 = vmatmul.mubr.f32.gmra.mrb[0].mxu0 %v1277
        %v1279 = vpop.f32.mrb[0].mxu0
        %v1280 = vadd.f32 0.0, %v1279
        %v1281 = vpop.f32.mrb[0].mxu0
        %v1282 = vadd.f32 0.0, %v1281
        %1283 = vmatprep.mubr.f32.mxu0 0.0
        %v1284 = vand.u32 %v1044, 4294901760
        %v1285 = vsub.f32 %v1044, %v1284
        %v1286 = vand.u32 %v1285, 4294901760
        %v1287 = vsub.f32 %v1285, %v1286
        %v1288 = vand.u32 %v1287, 4294901760
        %1289 = vmatmul.mubr.f32.gmra.mrb[0].mxu0 %v1288
        %v1290 = vpop.f32.mrb[0].mxu0
        %v1291 = vadd.f32 0.0, %v1290
        %v1292 = vpop.f32.mrb[0].mxu0
        %v1293 = vadd.f32 0.0, %v1292
        %1294 = vmatprep.mubr.f32.mxu0 0.0
        %v1295 = vand.u32 %v1047, 4294901760
        %v1296 = vsub.f32 %v1047, %v1295
        %v1297 = vand.u32 %v1296, 4294901760
        %v1298 = vsub.f32 %v1296, %v1297
        %v1299 = vand.u32 %v1298, 4294901760
        %1300 = vmatmul.mubr.f32.gmra.mrb[0].mxu0 %v1299
        %v1301 = vpop.f32.mrb[0].mxu0
        %v1302 = vadd.f32 0.0, %v1301
        %v1303 = vpop.f32.mrb[0].mxu0
        %v1304 = vadd.f32 0.0, %v1303
        %1305 = vmatprep.mubr.f32.mxu0 0.0
        %v1306 = vand.u32 %v1050, 4294901760
        %v1307 = vsub.f32 %v1050, %v1306
        %v1308 = vand.u32 %v1307, 4294901760
        %v1309 = vsub.f32 %v1307, %v1308
        %v1310 = vand.u32 %v1309, 4294901760
        %1311 = vmatmul.mubr.f32.gmra.mrb[0].mxu0 %v1310
        %v1312 = vpop.f32.mrb[0].mxu0
        %v1313 = vadd.f32 0.0, %v1312
        %v1314 = vpop.f32.mrb[0].mxu0
        %v1315 = vadd.f32 0.0, %v1314
        %1316 = vmatprep.mubr.f32.mxu0 0.0
        %v1317 = vand.u32 %v1053, 4294901760
        %v1318 = vsub.f32 %v1053, %v1317
        %v1319 = vand.u32 %v1318, 4294901760
        %v1320 = vsub.f32 %v1318, %v1319
        %v1321 = vand.u32 %v1320, 4294901760
        %1322 = vmatmul.mubr.f32.gmra.mrb[0].mxu0 %v1321
        %v1323 = vpop.f32.mrb[0].mxu0
        %v1324 = vadd.f32 0.0, %v1323
        %v1325 = vpop.f32.mrb[0].mxu0
        %v1326 = vadd.f32 0.0, %v1325
        %1327 = vmatprep.mubr.f32.mxu0 0.0
        %v1328 = vand.u32 %v1056, 4294901760
        %v1329 = vsub.f32 %v1056, %v1328
        %v1330 = vand.u32 %v1329, 4294901760
        %v1331 = vsub.f32 %v1329, %v1330
        %v1332 = vand.u32 %v1331, 4294901760
        %1333 = vmatmul.mubr.f32.gmra.mrb[0].mxu0 %v1332
        %v1334 = vpop.f32.mrb[0].mxu0
        %v1335 = vadd.f32 0.0, %v1334
        %v1336 = vpop.f32.mrb[0].mxu0
        %v1337 = vadd.f32 0.0, %v1336
        %1338 = vmatprep.mubr.f32.mxu0 0.0
        %v1339 = vand.u32 %v1059, 4294901760
        %v1340 = vsub.f32 %v1059, %v1339
        %v1341 = vand.u32 %v1340, 4294901760
        %v1342 = vsub.f32 %v1340, %v1341
        %v1343 = vand.u32 %v1342, 4294901760
        %1344 = vmatmul.mubr.f32.gmra.mrb[0].mxu0 %v1343
        %v1345 = vpop.f32.mrb[0].mxu0
        %v1346 = vadd.f32 0.0, %v1345
        %v1347 = vpop.f32.mrb[0].mxu0
        %v1348 = vadd.f32 0.0, %v1347
        %1349 = vmatprep.mubr.f32.mxu0 0.0
        %v1350 = vand.u32 %v1062, 4294901760
        %v1351 = vsub.f32 %v1062, %v1350
        %v1352 = vand.u32 %v1351, 4294901760
        %v1353 = vsub.f32 %v1351, %v1352
        %v1354 = vand.u32 %v1353, 4294901760
        %1355 = vmatmul.mubr.f32.gmra.mrb[0].mxu0 %v1354
        %v1356 = vpop.f32.mrb[0].mxu0
        %v1357 = vadd.f32 0.0, %v1356
        %v1358 = vpop.f32.mrb[0].mxu0
        %v1359 = vadd.f32 0.0, %v1358
        %1360 = vmatprep.mubr.f32.mxu0 0.0
        %v1361 = vand.u32 %v1065, 4294901760
        %v1362 = vsub.f32 %v1065, %v1361
        %v1363 = vand.u32 %v1362, 4294901760
        %v1364 = vsub.f32 %v1362, %v1363
        %v1365 = vand.u32 %v1364, 4294901760
        %1366 = vmatmul.mubr.f32.gmra.mrb[0].mxu0 %v1365
        %v1367 = vpop.f32.mrb[0].mxu0
        %v1368 = vadd.f32 0.0, %v1367
        %v1369 = vpop.f32.mrb[0].mxu0
        %v1370 = vadd.f32 0.0, %v1369
        %1371 = vmatprep.mubr.f32.mxu0 0.0
        %v1372 = vand.u32 %v1068, 4294901760
        %v1373 = vsub.f32 %v1068, %v1372
        %v1374 = vand.u32 %v1373, 4294901760
        %v1375 = vsub.f32 %v1373, %v1374
        %v1376 = vand.u32 %v1375, 4294901760
        %1377 = vmatmul.mubr.f32.gmra.mrb[0].mxu0 %v1376
        %v1378 = vpop.f32.mrb[0].mxu0
        %v1379 = vadd.f32 0.0, %v1378
        %v1380 = vpop.f32.mrb[0].mxu0
        %v1381 = vadd.f32 0.0, %v1380
        %1382 = vmatprep.mubr.f32.mxu0 0.0
        %v1383 = vand.u32 %v1071, 4294901760
        %v1384 = vsub.f32 %v1071, %v1383
        %v1385 = vand.u32 %v1384, 4294901760
        %v1386 = vsub.f32 %v1384, %v1385
        %v1387 = vand.u32 %v1386, 4294901760
        %1388 = vmatmul.mubr.f32.gmra.mrb[0].mxu0 %v1387
        %v1389 = vpop.f32.mrb[0].mxu0
        %v1390 = vadd.f32 0.0, %v1389
        %v1391 = vpop.f32.mrb[0].mxu0
        %v1392 = vadd.f32 0.0, %v1391
        %1393 = vmatprep.mubr.f32.mxu0 0.0
        %v1394 = vand.u32 %v1074, 4294901760
        %v1395 = vsub.f32 %v1074, %v1394
        %v1396 = vand.u32 %v1395, 4294901760
        %v1397 = vsub.f32 %v1395, %v1396
        %v1398 = vand.u32 %v1397, 4294901760
        %1399 = vmatmul.mubr.f32.gmra.mrb[0].mxu0 %v1398
        %v1400 = vpop.f32.mrb[0].mxu0
        %v1401 = vadd.f32 0.0, %v1400
        %v1402 = vpop.f32.mrb[0].mxu0
        %v1403 = vadd.f32 0.0, %v1402
        %1404 = vmatprep.mubr.f32.mxu0 0.0
        %v1405 = vand.u32 %v1077, 4294901760
        %v1406 = vsub.f32 %v1077, %v1405
        %v1407 = vand.u32 %v1406, 4294901760
        %v1408 = vsub.f32 %v1406, %v1407
        %v1409 = vand.u32 %v1408, 4294901760
        %1410 = vmatmul.mubr.f32.gmra.mrb[0].mxu0 %v1409
        %v1411 = vpop.f32.mrb[0].mxu0
        %v1412 = vadd.f32 0.0, %v1411
        %v1413 = vpop.f32.mrb[0].mxu0
        %v1414 = vadd.f32 0.0, %v1413
        %1415 = vdwg.mxu0
        %v1416 = vand.u32 %v999, 4294901760
        %v1417 = vsub.f32 %v999, %v1416
        %v1418 = vand.u32 %v1417, 4294901760
        %v1419 = vsub.f32 %v1417, %v1418
        %v1420 = vand.u32 %v1419, 4294901760
        %1421 = vmatprep.subr.mxu0 %v1420
        %v1422 = vand.u32 %v998, 4294901760
        %v1423 = vsub.f32 %v998, %v1422
        %v1424 = vand.u32 %v1423, 4294901760
        %v1425 = vsub.f32 %v1423, %v1424
        %v1426 = vand.u32 %v1425, 4294901760
        %1427 = vmatpush1.msra.mxu0 %v1426
        %v1428 = vand.u32 %v1001, 4294901760
        %v1429 = vsub.f32 %v1001, %v1428
        %v1430 = vand.u32 %v1429, 4294901760
        %v1431 = vsub.f32 %v1429, %v1430
        %v1432 = vand.u32 %v1431, 4294901760
        %1433 = vmatprep.subr.mxu0 %v1432
        %v1434 = vand.u32 %v1000, 4294901760
        %v1435 = vsub.f32 %v1000, %v1434
        %v1436 = vand.u32 %v1435, 4294901760
        %v1437 = vsub.f32 %v1435, %v1436
        %v1438 = vand.u32 %v1437, 4294901760
        %1439 = vmatpush1.msra.mxu0 %v1438
        %v1440 = vand.u32 %v1003, 4294901760
        %v1441 = vsub.f32 %v1003, %v1440
        %v1442 = vand.u32 %v1441, 4294901760
        %v1443 = vsub.f32 %v1441, %v1442
        %v1444 = vand.u32 %v1443, 4294901760
        %1445 = vmatprep.subr.mxu0 %v1444
        %v1446 = vand.u32 %v1002, 4294901760
        %v1447 = vsub.f32 %v1002, %v1446
        %v1448 = vand.u32 %v1447, 4294901760
        %v1449 = vsub.f32 %v1447, %v1448
        %v1450 = vand.u32 %v1449, 4294901760
        %1451 = vmatpush1.msra.mxu0 %v1450
        %v1452 = vand.u32 %v1005, 4294901760
        %v1453 = vsub.f32 %v1005, %v1452
        %v1454 = vand.u32 %v1453, 4294901760
        %v1455 = vsub.f32 %v1453, %v1454
        %v1456 = vand.u32 %v1455, 4294901760
        %1457 = vmatprep.subr.mxu0 %v1456
        %v1458 = vand.u32 %v1004, 4294901760
        %v1459 = vsub.f32 %v1004, %v1458
        %v1460 = vand.u32 %v1459, 4294901760
        %v1461 = vsub.f32 %v1459, %v1460
        %v1462 = vand.u32 %v1461, 4294901760
        %1463 = vmatpush1.msra.mxu0 %v1462
        %1464 = vmatprep.subr.mxu0 0.0
        %1465 = vmatpush1.msra.mxu0 0.0
        %1466 = vmatprep.subr.mxu0 0.0
        %1467 = vmatpush1.msra.mxu0 0.0
        %1468 = vmatprep.subr.mxu0 0.0
        %1469 = vmatpush1.msra.mxu0 0.0
        %1470 = vmatprep.subr.mxu0 0.0
        %1471 = vmatpush1.msra.mxu0 0.0
        %1472 = vmatprep.subr.mxu0 0.0
        %1473 = vmatpush1.msra.mxu0 0.0
        %1474 = vmatprep.subr.mxu0 0.0
        %1475 = vmatpush1.msra.mxu0 0.0
        %1476 = vmatprep.subr.mxu0 0.0
        %1477 = vmatpush1.msra.mxu0 0.0
        %1478 = vmatprep.subr.mxu0 0.0
        %1479 = vmatpush1.msra.mxu0 0.0
        %1480 = vmatprep.subr.mxu0 0.0
        %1481 = vmatpush1.msra.mxu0 0.0
        %1482 = vmatprep.subr.mxu0 0.0
        %1483 = vmatpush1.msra.mxu0 0.0
        %1484 = vmatprep.subr.mxu0 0.0
        %1485 = vmatpush1.msra.mxu0 0.0
        %1486 = vmatprep.subr.mxu0 0.0
        %1487 = vmatpush1.msra.mxu0 0.0
        %1488 = vmatprep.subr.mxu0 0.0
        %1489 = vmatpush1.msra.mxu0 0.0
        %1490 = vmatprep.subr.mxu0 0.0
        %1491 = vmatpush1.msra.mxu0 0.0
        %1492 = vmatprep.subr.mxu0 0.0
        %1493 = vmatpush1.msra.mxu0 0.0
        %1494 = vmatprep.subr.mxu0 0.0
        %1495 = vmatpush1.msra.mxu0 0.0
        %1496 = vmatprep.subr.mxu0 0.0
        %1497 = vmatpush1.msra.mxu0 0.0
        %1498 = vmatprep.subr.mxu0 0.0
        %1499 = vmatpush1.msra.mxu0 0.0
        %1500 = vmatprep.subr.mxu0 0.0
        %1501 = vmatpush1.msra.mxu0 0.0
        %1502 = vmatprep.subr.mxu0 0.0
        %1503 = vmatpush1.msra.mxu0 0.0
        %1504 = vmatprep.subr.mxu0 0.0
        %1505 = vmatpush1.msra.mxu0 0.0
        %1506 = vmatprep.subr.mxu0 0.0
        %1507 = vmatpush1.msra.mxu0 0.0
        %1508 = vmatprep.subr.mxu0 0.0
        %1509 = vmatpush1.msra.mxu0 0.0
        %1510 = vmatprep.subr.mxu0 0.0
        %1511 = vmatpush1.msra.mxu0 0.0
        %1512 = vmatprep.subr.mxu0 0.0
        %1513 = vmatpush1.msra.mxu0 0.0
        %1514 = vmatprep.subr.mxu0 0.0
        %1515 = vmatpush1.msra.mxu0 0.0
        %1516 = vmatprep.subr.mxu0 0.0
        %1517 = vmatpush1.msra.mxu0 0.0
        %1518 = vmatprep.subr.mxu0 0.0
        %1519 = vmatpush1.msra.mxu0 0.0
        %1520 = vmatprep.mubr.f32.mxu0 0.0
        %v1521 = vand.u32 %v1008, 4294901760
        %1522 = vmatmul.mubr.f32.gmra.mrb[0].mxu0 %v1521
        %v1523 = vpop.f32.mrb[0].mxu0
        %v1524 = vadd.f32 %v1159, %v1523
        %v1525 = vpop.f32.mrb[0].mxu0
        %v1526 = vadd.f32 %v1161, %v1525
        %1527 = vmatprep.mubr.f32.mxu0 0.0
        %v1528 = vand.u32 %v1011, 4294901760
        %1529 = vmatmul.mubr.f32.gmra.mrb[0].mxu0 %v1528
        %v1530 = vpop.f32.mrb[0].mxu0
        %v1531 = vadd.f32 %v1170, %v1530
        %v1532 = vpop.f32.mrb[0].mxu0
        %v1533 = vadd.f32 %v1172, %v1532
        %1534 = vmatprep.mubr.f32.mxu0 0.0
        %v1535 = vand.u32 %v1014, 4294901760
        %1536 = vmatmul.mubr.f32.gmra.mrb[0].mxu0 %v1535
        %v1537 = vpop.f32.mrb[0].mxu0
        %v1538 = vadd.f32 %v1181, %v1537
        %v1539 = vpop.f32.mrb[0].mxu0
        %v1540 = vadd.f32 %v1183, %v1539
        %1541 = vmatprep.mubr.f32.mxu0 0.0
        %v1542 = vand.u32 %v1017, 4294901760
        %1543 = vmatmul.mubr.f32.gmra.mrb[0].mxu0 %v1542
        %v1544 = vpop.f32.mrb[0].mxu0
        %v1545 = vadd.f32 %v1192, %v1544
        %v1546 = vpop.f32.mrb[0].mxu0
        %v1547 = vadd.f32 %v1194, %v1546
        %1548 = vmatprep.mubr.f32.mxu0 0.0
        %v1549 = vand.u32 %v1020, 4294901760
        %1550 = vmatmul.mubr.f32.gmra.mrb[0].mxu0 %v1549
        %v1551 = vpop.f32.mrb[0].mxu0
        %v1552 = vadd.f32 %v1203, %v1551
        %v1553 = vpop.f32.mrb[0].mxu0
        %v1554 = vadd.f32 %v1205, %v1553
        %1555 = vmatprep.mubr.f32.mxu0 0.0
        %v1556 = vand.u32 %v1023, 4294901760
        %1557 = vmatmul.mubr.f32.gmra.mrb[0].mxu0 %v1556
        %v1558 = vpop.f32.mrb[0].mxu0
        %v1559 = vadd.f32 %v1214, %v1558
        %v1560 = vpop.f32.mrb[0].mxu0
        %v1561 = vadd.f32 %v1216, %v1560
        %1562 = vmatprep.mubr.f32.mxu0 0.0
        %v1563 = vand.u32 %v1026, 4294901760
        %1564 = vmatmul.mubr.f32.gmra.mrb[0].mxu0 %v1563
        %v1565 = vpop.f32.mrb[0].mxu0
        %v1566 = vadd.f32 %v1225, %v1565
        %v1567 = vpop.f32.mrb[0].mxu0
        %v1568 = vadd.f32 %v1227, %v1567
        %1569 = vmatprep.mubr.f32.mxu0 0.0
        %v1570 = vand.u32 %v1029, 4294901760
        %1571 = vmatmul.mubr.f32.gmra.mrb[0].mxu0 %v1570
        %v1572 = vpop.f32.mrb[0].mxu0
        %v1573 = vadd.f32 %v1236, %v1572
        %v1574 = vpop.f32.mrb[0].mxu0
        %v1575 = vadd.f32 %v1238, %v1574
        %1576 = vmatprep.mubr.f32.mxu0 0.0
        %v1577 = vand.u32 %v1032, 4294901760
        %1578 = vmatmul.mubr.f32.gmra.mrb[0].mxu0 %v1577
        %v1579 = vpop.f32.mrb[0].mxu0
        %v1580 = vadd.f32 %v1247, %v1579
        %v1581 = vpop.f32.mrb[0].mxu0
        %v1582 = vadd.f32 %v1249, %v1581
        %1583 = vmatprep.mubr.f32.mxu0 0.0
        %v1584 = vand.u32 %v1035, 4294901760
        %1585 = vmatmul.mubr.f32.gmra.mrb[0].mxu0 %v1584
        %v1586 = vpop.f32.mrb[0].mxu0
        %v1587 = vadd.f32 %v1258, %v1586
        %v1588 = vpop.f32.mrb[0].mxu0
        %v1589 = vadd.f32 %v1260, %v1588
        %1590 = vmatprep.mubr.f32.mxu0 0.0
        %v1591 = vand.u32 %v1038, 4294901760
        %1592 = vmatmul.mubr.f32.gmra.mrb[0].mxu0 %v1591
        %v1593 = vpop.f32.mrb[0].mxu0
        %v1594 = vadd.f32 %v1269, %v1593
        %v1595 = vpop.f32.mrb[0].mxu0
        %v1596 = vadd.f32 %v1271, %v1595
        %1597 = vmatprep.mubr.f32.mxu0 0.0
        %v1598 = vand.u32 %v1041, 4294901760
        %1599 = vmatmul.mubr.f32.gmra.mrb[0].mxu0 %v1598
        %v1600 = vpop.f32.mrb[0].mxu0
        %v1601 = vadd.f32 %v1280, %v1600
        %v1602 = vpop.f32.mrb[0].mxu0
        %v1603 = vadd.f32 %v1282, %v1602
        %1604 = vmatprep.mubr.f32.mxu0 0.0
        %v1605 = vand.u32 %v1044, 4294901760
        %1606 = vmatmul.mubr.f32.gmra.mrb[0].mxu0 %v1605
        %v1607 = vpop.f32.mrb[0].mxu0
        %v1608 = vadd.f32 %v1291, %v1607
        %v1609 = vpop.f32.mrb[0].mxu0
        %v1610 = vadd.f32 %v1293, %v1609
        %1611 = vmatprep.mubr.f32.mxu0 0.0
        %v1612 = vand.u32 %v1047, 4294901760
        %1613 = vmatmul.mubr.f32.gmra.mrb[0].mxu0 %v1612
        %v1614 = vpop.f32.mrb[0].mxu0
        %v1615 = vadd.f32 %v1302, %v1614
        %v1616 = vpop.f32.mrb[0].mxu0
        %v1617 = vadd.f32 %v1304, %v1616
        %1618 = vmatprep.mubr.f32.mxu0 0.0
        %v1619 = vand.u32 %v1050, 4294901760
        %1620 = vmatmul.mubr.f32.gmra.mrb[0].mxu0 %v1619
        %v1621 = vpop.f32.mrb[0].mxu0
        %v1622 = vadd.f32 %v1313, %v1621
        %v1623 = vpop.f32.mrb[0].mxu0
        %v1624 = vadd.f32 %v1315, %v1623
        %1625 = vmatprep.mubr.f32.mxu0 0.0
        %v1626 = vand.u32 %v1053, 4294901760
        %1627 = vmatmul.mubr.f32.gmra.mrb[0].mxu0 %v1626
        %v1628 = vpop.f32.mrb[0].mxu0
        %v1629 = vadd.f32 %v1324, %v1628
        %v1630 = vpop.f32.mrb[0].mxu0
        %v1631 = vadd.f32 %v1326, %v1630
        %1632 = vmatprep.mubr.f32.mxu0 0.0
        %v1633 = vand.u32 %v1056, 4294901760
        %1634 = vmatmul.mubr.f32.gmra.mrb[0].mxu0 %v1633
        %v1635 = vpop.f32.mrb[0].mxu0
        %v1636 = vadd.f32 %v1335, %v1635
        %v1637 = vpop.f32.mrb[0].mxu0
        %v1638 = vadd.f32 %v1337, %v1637
        %1639 = vmatprep.mubr.f32.mxu0 0.0
        %v1640 = vand.u32 %v1059, 4294901760
        %1641 = vmatmul.mubr.f32.gmra.mrb[0].mxu0 %v1640
        %v1642 = vpop.f32.mrb[0].mxu0
        %v1643 = vadd.f32 %v1346, %v1642
        %v1644 = vpop.f32.mrb[0].mxu0
        %v1645 = vadd.f32 %v1348, %v1644
        %1646 = vmatprep.mubr.f32.mxu0 0.0
        %v1647 = vand.u32 %v1062, 4294901760
        %1648 = vmatmul.mubr.f32.gmra.mrb[0].mxu0 %v1647
        %v1649 = vpop.f32.mrb[0].mxu0
        %v1650 = vadd.f32 %v1357, %v1649
        %v1651 = vpop.f32.mrb[0].mxu0
        %v1652 = vadd.f32 %v1359, %v1651
        %1653 = vmatprep.mubr.f32.mxu0 0.0
        %v1654 = vand.u32 %v1065, 4294901760
        %1655 = vmatmul.mubr.f32.gmra.mrb[0].mxu0 %v1654
        %v1656 = vpop.f32.mrb[0].mxu0
        %v1657 = vadd.f32 %v1368, %v1656
        %v1658 = vpop.f32.mrb[0].mxu0
        %v1659 = vadd.f32 %v1370, %v1658
        %1660 = vmatprep.mubr.f32.mxu0 0.0
        %v1661 = vand.u32 %v1068, 4294901760
        %1662 = vmatmul.mubr.f32.gmra.mrb[0].mxu0 %v1661
        %v1663 = vpop.f32.mrb[0].mxu0
        %v1664 = vadd.f32 %v1379, %v1663
        %v1665 = vpop.f32.mrb[0].mxu0
        %v1666 = vadd.f32 %v1381, %v1665
        %1667 = vmatprep.mubr.f32.mxu0 0.0
        %v1668 = vand.u32 %v1071, 4294901760
        %1669 = vmatmul.mubr.f32.gmra.mrb[0].mxu0 %v1668
        %v1670 = vpop.f32.mrb[0].mxu0
        %v1671 = vadd.f32 %v1390, %v1670
        %v1672 = vpop.f32.mrb[0].mxu0
        %v1673 = vadd.f32 %v1392, %v1672
        %1674 = vmatprep.mubr.f32.mxu0 0.0
        %v1675 = vand.u32 %v1074, 4294901760
        %1676 = vmatmul.mubr.f32.gmra.mrb[0].mxu0 %v1675
        %v1677 = vpop.f32.mrb[0].mxu0
        %v1678 = vadd.f32 %v1401, %v1677
        %v1679 = vpop.f32.mrb[0].mxu0
        %v1680 = vadd.f32 %v1403, %v1679
        %1681 = vmatprep.mubr.f32.mxu0 0.0
        %v1682 = vand.u32 %v1077, 4294901760
        %1683 = vmatmul.mubr.f32.gmra.mrb[0].mxu0 %v1682
        %v1684 = vpop.f32.mrb[0].mxu0
        %v1685 = vadd.f32 %v1412, %v1684
        %v1686 = vpop.f32.mrb[0].mxu0
        %v1687 = vadd.f32 %v1414, %v1686
        %1688 = vdwg.mxu0
        %v1689 = vand.u32 %v999, 4294901760
        %v1690 = vsub.f32 %v999, %v1689
        %1691 = vmatprep.subr.mxu0 %v1690
        %v1692 = vand.u32 %v998, 4294901760
        %v1693 = vsub.f32 %v998, %v1692
        %1694 = vmatpush1.msra.mxu0 %v1693
        %v1695 = vand.u32 %v1001, 4294901760
        %v1696 = vsub.f32 %v1001, %v1695
        %1697 = vmatprep.subr.mxu0 %v1696
        %v1698 = vand.u32 %v1000, 4294901760
        %v1699 = vsub.f32 %v1000, %v1698
        %1700 = vmatpush1.msra.mxu0 %v1699
        %v1701 = vand.u32 %v1003, 4294901760
        %v1702 = vsub.f32 %v1003, %v1701
        %1703 = vmatprep.subr.mxu0 %v1702
        %v1704 = vand.u32 %v1002, 4294901760
        %v1705 = vsub.f32 %v1002, %v1704
        %1706 = vmatpush1.msra.mxu0 %v1705
        %v1707 = vand.u32 %v1005, 4294901760
        %v1708 = vsub.f32 %v1005, %v1707
        %1709 = vmatprep.subr.mxu0 %v1708
        %v1710 = vand.u32 %v1004, 4294901760
        %v1711 = vsub.f32 %v1004, %v1710
        %1712 = vmatpush1.msra.mxu0 %v1711
        %1713 = vmatprep.subr.mxu0 0.0
        %1714 = vmatpush1.msra.mxu0 0.0
        %1715 = vmatprep.subr.mxu0 0.0
        %1716 = vmatpush1.msra.mxu0 0.0
        %1717 = vmatprep.subr.mxu0 0.0
        %1718 = vmatpush1.msra.mxu0 0.0
        %1719 = vmatprep.subr.mxu0 0.0
        %1720 = vmatpush1.msra.mxu0 0.0
        %1721 = vmatprep.subr.mxu0 0.0
        %1722 = vmatpush1.msra.mxu0 0.0
        %1723 = vmatprep.subr.mxu0 0.0
        %1724 = vmatpush1.msra.mxu0 0.0
        %1725 = vmatprep.subr.mxu0 0.0
        %1726 = vmatpush1.msra.mxu0 0.0
        %1727 = vmatprep.subr.mxu0 0.0
        %1728 = vmatpush1.msra.mxu0 0.0
        %1729 = vmatprep.subr.mxu0 0.0
        %1730 = vmatpush1.msra.mxu0 0.0
        %1731 = vmatprep.subr.mxu0 0.0
        %1732 = vmatpush1.msra.mxu0 0.0
        %1733 = vmatprep.subr.mxu0 0.0
        %1734 = vmatpush1.msra.mxu0 0.0
        %1735 = vmatprep.subr.mxu0 0.0
        %1736 = vmatpush1.msra.mxu0 0.0
        %1737 = vmatprep.subr.mxu0 0.0
        %1738 = vmatpush1.msra.mxu0 0.0
        %1739 = vmatprep.subr.mxu0 0.0
        %1740 = vmatpush1.msra.mxu0 0.0
        %1741 = vmatprep.subr.mxu0 0.0
        %1742 = vmatpush1.msra.mxu0 0.0
        %1743 = vmatprep.subr.mxu0 0.0
        %1744 = vmatpush1.msra.mxu0 0.0
        %1745 = vmatprep.subr.mxu0 0.0
        %1746 = vmatpush1.msra.mxu0 0.0
        %1747 = vmatprep.subr.mxu0 0.0
        %1748 = vmatpush1.msra.mxu0 0.0
        %1749 = vmatprep.subr.mxu0 0.0
        %1750 = vmatpush1.msra.mxu0 0.0
        %1751 = vmatprep.subr.mxu0 0.0
        %1752 = vmatpush1.msra.mxu0 0.0
        %1753 = vmatprep.subr.mxu0 0.0
        %1754 = vmatpush1.msra.mxu0 0.0
        %1755 = vmatprep.subr.mxu0 0.0
        %1756 = vmatpush1.msra.mxu0 0.0
        %1757 = vmatprep.subr.mxu0 0.0
        %1758 = vmatpush1.msra.mxu0 0.0
        %1759 = vmatprep.subr.mxu0 0.0
        %1760 = vmatpush1.msra.mxu0 0.0
        %1761 = vmatprep.subr.mxu0 0.0
        %1762 = vmatpush1.msra.mxu0 0.0
        %1763 = vmatprep.subr.mxu0 0.0
        %1764 = vmatpush1.msra.mxu0 0.0
        %1765 = vmatprep.subr.mxu0 0.0
        %1766 = vmatpush1.msra.mxu0 0.0
        %1767 = vmatprep.subr.mxu0 0.0
        %1768 = vmatpush1.msra.mxu0 0.0
        %1769 = vmatprep.mubr.f32.mxu0 0.0
        %v1770 = vand.u32 %v1008, 4294901760
        %v1771 = vsub.f32 %v1008, %v1770
        %1772 = vmatmul.mubr.f32.gmra.mrb[0].mxu0 %v1771
        %v1773 = vpop.f32.mrb[0].mxu0
        %v1774 = vadd.f32 %v1524, %v1773
        %v1775 = vpop.f32.mrb[0].mxu0
        %v1776 = vadd.f32 %v1526, %v1775
        %1777 = vmatprep.mubr.f32.mxu0 0.0
        %v1778 = vand.u32 %v1011, 4294901760
        %v1779 = vsub.f32 %v1011, %v1778
        %1780 = vmatmul.mubr.f32.gmra.mrb[0].mxu0 %v1779
        %v1781 = vpop.f32.mrb[0].mxu0
        %v1782 = vadd.f32 %v1531, %v1781
        %v1783 = vpop.f32.mrb[0].mxu0
        %v1784 = vadd.f32 %v1533, %v1783
        %1785 = vmatprep.mubr.f32.mxu0 0.0
        %v1786 = vand.u32 %v1014, 4294901760
        %v1787 = vsub.f32 %v1014, %v1786
        %1788 = vmatmul.mubr.f32.gmra.mrb[0].mxu0 %v1787
        %v1789 = vpop.f32.mrb[0].mxu0
        %v1790 = vadd.f32 %v1538, %v1789
        %v1791 = vpop.f32.mrb[0].mxu0
        %v1792 = vadd.f32 %v1540, %v1791
        %1793 = vmatprep.mubr.f32.mxu0 0.0
        %v1794 = vand.u32 %v1017, 4294901760
        %v1795 = vsub.f32 %v1017, %v1794
        %1796 = vmatmul.mubr.f32.gmra.mrb[0].mxu0 %v1795
        %v1797 = vpop.f32.mrb[0].mxu0
        %v1798 = vadd.f32 %v1545, %v1797
        %v1799 = vpop.f32.mrb[0].mxu0
        %v1800 = vadd.f32 %v1547, %v1799
        %1801 = vmatprep.mubr.f32.mxu0 0.0
        %v1802 = vand.u32 %v1020, 4294901760
        %v1803 = vsub.f32 %v1020, %v1802
        %1804 = vmatmul.mubr.f32.gmra.mrb[0].mxu0 %v1803
        %v1805 = vpop.f32.mrb[0].mxu0
        %v1806 = vadd.f32 %v1552, %v1805
        %v1807 = vpop.f32.mrb[0].mxu0
        %v1808 = vadd.f32 %v1554, %v1807
        %1809 = vmatprep.mubr.f32.mxu0 0.0
        %v1810 = vand.u32 %v1023, 4294901760
        %v1811 = vsub.f32 %v1023, %v1810
        %1812 = vmatmul.mubr.f32.gmra.mrb[0].mxu0 %v1811
        %v1813 = vpop.f32.mrb[0].mxu0
        %v1814 = vadd.f32 %v1559, %v1813
        %v1815 = vpop.f32.mrb[0].mxu0
        %v1816 = vadd.f32 %v1561, %v1815
        %1817 = vmatprep.mubr.f32.mxu0 0.0
        %v1818 = vand.u32 %v1026, 4294901760
        %v1819 = vsub.f32 %v1026, %v1818
        %1820 = vmatmul.mubr.f32.gmra.mrb[0].mxu0 %v1819
        %v1821 = vpop.f32.mrb[0].mxu0
        %v1822 = vadd.f32 %v1566, %v1821
        %v1823 = vpop.f32.mrb[0].mxu0
        %v1824 = vadd.f32 %v1568, %v1823
        %1825 = vmatprep.mubr.f32.mxu0 0.0
        %v1826 = vand.u32 %v1029, 4294901760
        %v1827 = vsub.f32 %v1029, %v1826
        %1828 = vmatmul.mubr.f32.gmra.mrb[0].mxu0 %v1827
        %v1829 = vpop.f32.mrb[0].mxu0
        %v1830 = vadd.f32 %v1573, %v1829
        %v1831 = vpop.f32.mrb[0].mxu0
        %v1832 = vadd.f32 %v1575, %v1831
        %1833 = vmatprep.mubr.f32.mxu0 0.0
        %v1834 = vand.u32 %v1032, 4294901760
        %v1835 = vsub.f32 %v1032, %v1834
        %1836 = vmatmul.mubr.f32.gmra.mrb[0].mxu0 %v1835
        %v1837 = vpop.f32.mrb[0].mxu0
        %v1838 = vadd.f32 %v1580, %v1837
        %v1839 = vpop.f32.mrb[0].mxu0
        %v1840 = vadd.f32 %v1582, %v1839
        %1841 = vmatprep.mubr.f32.mxu0 0.0
        %v1842 = vand.u32 %v1035, 4294901760
        %v1843 = vsub.f32 %v1035, %v1842
        %1844 = vmatmul.mubr.f32.gmra.mrb[0].mxu0 %v1843
        %v1845 = vpop.f32.mrb[0].mxu0
        %v1846 = vadd.f32 %v1587, %v1845
        %v1847 = vpop.f32.mrb[0].mxu0
        %v1848 = vadd.f32 %v1589, %v1847
        %1849 = vmatprep.mubr.f32.mxu0 0.0
        %v1850 = vand.u32 %v1038, 4294901760
        %v1851 = vsub.f32 %v1038, %v1850
        %1852 = vmatmul.mubr.f32.gmra.mrb[0].mxu0 %v1851
        %v1853 = vpop.f32.mrb[0].mxu0
        %v1854 = vadd.f32 %v1594, %v1853
        %v1855 = vpop.f32.mrb[0].mxu0
        %v1856 = vadd.f32 %v1596, %v1855
        %1857 = vmatprep.mubr.f32.mxu0 0.0
        %v1858 = vand.u32 %v1041, 4294901760
        %v1859 = vsub.f32 %v1041, %v1858
        %1860 = vmatmul.mubr.f32.gmra.mrb[0].mxu0 %v1859
        %v1861 = vpop.f32.mrb[0].mxu0
        %v1862 = vadd.f32 %v1601, %v1861
        %v1863 = vpop.f32.mrb[0].mxu0
        %v1864 = vadd.f32 %v1603, %v1863
        %1865 = vmatprep.mubr.f32.mxu0 0.0
        %v1866 = vand.u32 %v1044, 4294901760
        %v1867 = vsub.f32 %v1044, %v1866
        %1868 = vmatmul.mubr.f32.gmra.mrb[0].mxu0 %v1867
        %v1869 = vpop.f32.mrb[0].mxu0
        %v1870 = vadd.f32 %v1608, %v1869
        %v1871 = vpop.f32.mrb[0].mxu0
        %v1872 = vadd.f32 %v1610, %v1871
        %1873 = vmatprep.mubr.f32.mxu0 0.0
        %v1874 = vand.u32 %v1047, 4294901760
        %v1875 = vsub.f32 %v1047, %v1874
        %1876 = vmatmul.mubr.f32.gmra.mrb[0].mxu0 %v1875
        %v1877 = vpop.f32.mrb[0].mxu0
        %v1878 = vadd.f32 %v1615, %v1877
        %v1879 = vpop.f32.mrb[0].mxu0
        %v1880 = vadd.f32 %v1617, %v1879
        %1881 = vmatprep.mubr.f32.mxu0 0.0
        %v1882 = vand.u32 %v1050, 4294901760
        %v1883 = vsub.f32 %v1050, %v1882
        %1884 = vmatmul.mubr.f32.gmra.mrb[0].mxu0 %v1883
        %v1885 = vpop.f32.mrb[0].mxu0
        %v1886 = vadd.f32 %v1622, %v1885
        %v1887 = vpop.f32.mrb[0].mxu0
        %v1888 = vadd.f32 %v1624, %v1887
        %1889 = vmatprep.mubr.f32.mxu0 0.0
        %v1890 = vand.u32 %v1053, 4294901760
        %v1891 = vsub.f32 %v1053, %v1890
        %1892 = vmatmul.mubr.f32.gmra.mrb[0].mxu0 %v1891
        %v1893 = vpop.f32.mrb[0].mxu0
        %v1894 = vadd.f32 %v1629, %v1893
        %v1895 = vpop.f32.mrb[0].mxu0
        %v1896 = vadd.f32 %v1631, %v1895
        %1897 = vmatprep.mubr.f32.mxu0 0.0
        %v1898 = vand.u32 %v1056, 4294901760
        %v1899 = vsub.f32 %v1056, %v1898
        %1900 = vmatmul.mubr.f32.gmra.mrb[0].mxu0 %v1899
        %v1901 = vpop.f32.mrb[0].mxu0
        %v1902 = vadd.f32 %v1636, %v1901
        %v1903 = vpop.f32.mrb[0].mxu0
        %v1904 = vadd.f32 %v1638, %v1903
        %1905 = vmatprep.mubr.f32.mxu0 0.0
        %v1906 = vand.u32 %v1059, 4294901760
        %v1907 = vsub.f32 %v1059, %v1906
        %1908 = vmatmul.mubr.f32.gmra.mrb[0].mxu0 %v1907
        %v1909 = vpop.f32.mrb[0].mxu0
        %v1910 = vadd.f32 %v1643, %v1909
        %v1911 = vpop.f32.mrb[0].mxu0
        %v1912 = vadd.f32 %v1645, %v1911
        %1913 = vmatprep.mubr.f32.mxu0 0.0
        %v1914 = vand.u32 %v1062, 4294901760
        %v1915 = vsub.f32 %v1062, %v1914
        %1916 = vmatmul.mubr.f32.gmra.mrb[0].mxu0 %v1915
        %v1917 = vpop.f32.mrb[0].mxu0
        %v1918 = vadd.f32 %v1650, %v1917
        %v1919 = vpop.f32.mrb[0].mxu0
        %v1920 = vadd.f32 %v1652, %v1919
        %1921 = vmatprep.mubr.f32.mxu0 0.0
        %v1922 = vand.u32 %v1065, 4294901760
        %v1923 = vsub.f32 %v1065, %v1922
        %1924 = vmatmul.mubr.f32.gmra.mrb[0].mxu0 %v1923
        %v1925 = vpop.f32.mrb[0].mxu0
        %v1926 = vadd.f32 %v1657, %v1925
        %v1927 = vpop.f32.mrb[0].mxu0
        %v1928 = vadd.f32 %v1659, %v1927
        %1929 = vmatprep.mubr.f32.mxu0 0.0
        %v1930 = vand.u32 %v1068, 4294901760
        %v1931 = vsub.f32 %v1068, %v1930
        %1932 = vmatmul.mubr.f32.gmra.mrb[0].mxu0 %v1931
        %v1933 = vpop.f32.mrb[0].mxu0
        %v1934 = vadd.f32 %v1664, %v1933
        %v1935 = vpop.f32.mrb[0].mxu0
        %v1936 = vadd.f32 %v1666, %v1935
        %1937 = vmatprep.mubr.f32.mxu0 0.0
        %v1938 = vand.u32 %v1071, 4294901760
        %v1939 = vsub.f32 %v1071, %v1938
        %1940 = vmatmul.mubr.f32.gmra.mrb[0].mxu0 %v1939
        %v1941 = vpop.f32.mrb[0].mxu0
        %v1942 = vadd.f32 %v1671, %v1941
        %v1943 = vpop.f32.mrb[0].mxu0
        %v1944 = vadd.f32 %v1673, %v1943
        %1945 = vmatprep.mubr.f32.mxu0 0.0
        %v1946 = vand.u32 %v1074, 4294901760
        %v1947 = vsub.f32 %v1074, %v1946
        %1948 = vmatmul.mubr.f32.gmra.mrb[0].mxu0 %v1947
        %v1949 = vpop.f32.mrb[0].mxu0
        %v1950 = vadd.f32 %v1678, %v1949
        %v1951 = vpop.f32.mrb[0].mxu0
        %v1952 = vadd.f32 %v1680, %v1951
        %1953 = vmatprep.mubr.f32.mxu0 0.0
        %v1954 = vand.u32 %v1077, 4294901760
        %v1955 = vsub.f32 %v1077, %v1954
        %1956 = vmatmul.mubr.f32.gmra.mrb[0].mxu0 %v1955
        %v1957 = vpop.f32.mrb[0].mxu0
        %v1958 = vadd.f32 %v1685, %v1957
        %v1959 = vpop.f32.mrb[0].mxu0
        %v1960 = vadd.f32 %v1687, %v1959
        %1961 = vdwg.mxu0
        %v1962 = vand.u32 %v999, 4294901760
        %1963 = vmatprep.subr.mxu0 %v1962
        %v1964 = vand.u32 %v998, 4294901760
        %1965 = vmatpush1.msra.mxu0 %v1964
        %v1966 = vand.u32 %v1001, 4294901760
        %1967 = vmatprep.subr.mxu0 %v1966
        %v1968 = vand.u32 %v1000, 4294901760
        %1969 = vmatpush1.msra.mxu0 %v1968
        %v1970 = vand.u32 %v1003, 4294901760
        %1971 = vmatprep.subr.mxu0 %v1970
        %v1972 = vand.u32 %v1002, 4294901760
        %1973 = vmatpush1.msra.mxu0 %v1972
        %v1974 = vand.u32 %v1005, 4294901760
        %1975 = vmatprep.subr.mxu0 %v1974
        %v1976 = vand.u32 %v1004, 4294901760
        %1977 = vmatpush1.msra.mxu0 %v1976
        %1978 = vmatprep.subr.mxu0 0.0
        %1979 = vmatpush1.msra.mxu0 0.0
        %1980 = vmatprep.subr.mxu0 0.0
        %1981 = vmatpush1.msra.mxu0 0.0
        %1982 = vmatprep.subr.mxu0 0.0
        %1983 = vmatpush1.msra.mxu0 0.0
        %1984 = vmatprep.subr.mxu0 0.0
        %1985 = vmatpush1.msra.mxu0 0.0
        %1986 = vmatprep.subr.mxu0 0.0
        %1987 = vmatpush1.msra.mxu0 0.0
        %1988 = vmatprep.subr.mxu0 0.0
        %1989 = vmatpush1.msra.mxu0 0.0
        %1990 = vmatprep.subr.mxu0 0.0
        %1991 = vmatpush1.msra.mxu0 0.0
        %1992 = vmatprep.subr.mxu0 0.0
        %1993 = vmatpush1.msra.mxu0 0.0
        %1994 = vmatprep.subr.mxu0 0.0
        %1995 = vmatpush1.msra.mxu0 0.0
        %1996 = vmatprep.subr.mxu0 0.0
        %1997 = vmatpush1.msra.mxu0 0.0
        %1998 = vmatprep.subr.mxu0 0.0
        %1999 = vmatpush1.msra.mxu0 0.0
        %2000 = vmatprep.subr.mxu0 0.0
        %2001 = vmatpush1.msra.mxu0 0.0
        %2002 = vmatprep.subr.mxu0 0.0
        %2003 = vmatpush1.msra.mxu0 0.0
        %2004 = vmatprep.subr.mxu0 0.0
        %2005 = vmatpush1.msra.mxu0 0.0
        %2006 = vmatprep.subr.mxu0 0.0
        %2007 = vmatpush1.msra.mxu0 0.0
        %2008 = vmatprep.subr.mxu0 0.0
        %2009 = vmatpush1.msra.mxu0 0.0
        %2010 = vmatprep.subr.mxu0 0.0
        %2011 = vmatpush1.msra.mxu0 0.0
        %2012 = vmatprep.subr.mxu0 0.0
        %2013 = vmatpush1.msra.mxu0 0.0
        %2014 = vmatprep.subr.mxu0 0.0
        %2015 = vmatpush1.msra.mxu0 0.0
        %2016 = vmatprep.subr.mxu0 0.0
        %2017 = vmatpush1.msra.mxu0 0.0
        %2018 = vmatprep.subr.mxu0 0.0
        %2019 = vmatpush1.msra.mxu0 0.0
        %2020 = vmatprep.subr.mxu0 0.0
        %2021 = vmatpush1.msra.mxu0 0.0
        %2022 = vmatprep.subr.mxu0 0.0
        %2023 = vmatpush1.msra.mxu0 0.0
        %2024 = vmatprep.subr.mxu0 0.0
        %2025 = vmatpush1.msra.mxu0 0.0
        %2026 = vmatprep.subr.mxu0 0.0
        %2027 = vmatpush1.msra.mxu0 0.0
        %2028 = vmatprep.subr.mxu0 0.0
        %2029 = vmatpush1.msra.mxu0 0.0
        %2030 = vmatprep.subr.mxu0 0.0
        %2031 = vmatpush1.msra.mxu0 0.0
        %2032 = vmatprep.subr.mxu0 0.0
        %2033 = vmatpush1.msra.mxu0 0.0
        %2034 = vmatprep.mubr.f32.mxu0 0.0
        %v2035 = vand.u32 %v1008, 4294901760
        %v2036 = vsub.f32 %v1008, %v2035
        %v2037 = vand.u32 %v2036, 4294901760
        %2038 = vmatmul.mubr.f32.gmra.mrb[0].mxu0 %v2037
        %v2039 = vpop.f32.mrb[0].mxu0
        %v2040 = vadd.f32 %v1774, %v2039
        %v2041 = vpop.f32.mrb[0].mxu0
        %v2042 = vadd.f32 %v1776, %v2041
        %2043 = vmatprep.mubr.f32.mxu0 0.0
        %v2044 = vand.u32 %v1011, 4294901760
        %v2045 = vsub.f32 %v1011, %v2044
        %v2046 = vand.u32 %v2045, 4294901760
        %2047 = vmatmul.mubr.f32.gmra.mrb[0].mxu0 %v2046
        %v2048 = vpop.f32.mrb[0].mxu0
        %v2049 = vadd.f32 %v1782, %v2048
        %v2050 = vpop.f32.mrb[0].mxu0
        %v2051 = vadd.f32 %v1784, %v2050
        %2052 = vmatprep.mubr.f32.mxu0 0.0
        %v2053 = vand.u32 %v1014, 4294901760
        %v2054 = vsub.f32 %v1014, %v2053
        %v2055 = vand.u32 %v2054, 4294901760
        %2056 = vmatmul.mubr.f32.gmra.mrb[0].mxu0 %v2055
        %v2057 = vpop.f32.mrb[0].mxu0
        %v2058 = vadd.f32 %v1790, %v2057
        %v2059 = vpop.f32.mrb[0].mxu0
        %v2060 = vadd.f32 %v1792, %v2059
        %2061 = vmatprep.mubr.f32.mxu0 0.0
        %v2062 = vand.u32 %v1017, 4294901760
        %v2063 = vsub.f32 %v1017, %v2062
        %v2064 = vand.u32 %v2063, 4294901760
        %2065 = vmatmul.mubr.f32.gmra.mrb[0].mxu0 %v2064
        %v2066 = vpop.f32.mrb[0].mxu0
        %v2067 = vadd.f32 %v1798, %v2066
        %v2068 = vpop.f32.mrb[0].mxu0
        %v2069 = vadd.f32 %v1800, %v2068
        %2070 = vmatprep.mubr.f32.mxu0 0.0
        %v2071 = vand.u32 %v1020, 4294901760
        %v2072 = vsub.f32 %v1020, %v2071
        %v2073 = vand.u32 %v2072, 4294901760
        %2074 = vmatmul.mubr.f32.gmra.mrb[0].mxu0 %v2073
        %v2075 = vpop.f32.mrb[0].mxu0
        %v2076 = vadd.f32 %v1806, %v2075
        %v2077 = vpop.f32.mrb[0].mxu0
        %v2078 = vadd.f32 %v1808, %v2077
        %2079 = vmatprep.mubr.f32.mxu0 0.0
        %v2080 = vand.u32 %v1023, 4294901760
        %v2081 = vsub.f32 %v1023, %v2080
        %v2082 = vand.u32 %v2081, 4294901760
        %2083 = vmatmul.mubr.f32.gmra.mrb[0].mxu0 %v2082
        %v2084 = vpop.f32.mrb[0].mxu0
        %v2085 = vadd.f32 %v1814, %v2084
        %v2086 = vpop.f32.mrb[0].mxu0
        %v2087 = vadd.f32 %v1816, %v2086
        %2088 = vmatprep.mubr.f32.mxu0 0.0
        %v2089 = vand.u32 %v1026, 4294901760
        %v2090 = vsub.f32 %v1026, %v2089
        %v2091 = vand.u32 %v2090, 4294901760
        %2092 = vmatmul.mubr.f32.gmra.mrb[0].mxu0 %v2091
        %v2093 = vpop.f32.mrb[0].mxu0
        %v2094 = vadd.f32 %v1822, %v2093
        %v2095 = vpop.f32.mrb[0].mxu0
        %v2096 = vadd.f32 %v1824, %v2095
        %2097 = vmatprep.mubr.f32.mxu0 0.0
        %v2098 = vand.u32 %v1029, 4294901760
        %v2099 = vsub.f32 %v1029, %v2098
        %v2100 = vand.u32 %v2099, 4294901760
        %2101 = vmatmul.mubr.f32.gmra.mrb[0].mxu0 %v2100
        %v2102 = vpop.f32.mrb[0].mxu0
        %v2103 = vadd.f32 %v1830, %v2102
        %v2104 = vpop.f32.mrb[0].mxu0
        %v2105 = vadd.f32 %v1832, %v2104
        %2106 = vmatprep.mubr.f32.mxu0 0.0
        %v2107 = vand.u32 %v1032, 4294901760
        %v2108 = vsub.f32 %v1032, %v2107
        %v2109 = vand.u32 %v2108, 4294901760
        %2110 = vmatmul.mubr.f32.gmra.mrb[0].mxu0 %v2109
        %v2111 = vpop.f32.mrb[0].mxu0
        %v2112 = vadd.f32 %v1838, %v2111
        %v2113 = vpop.f32.mrb[0].mxu0
        %v2114 = vadd.f32 %v1840, %v2113
        %2115 = vmatprep.mubr.f32.mxu0 0.0
        %v2116 = vand.u32 %v1035, 4294901760
        %v2117 = vsub.f32 %v1035, %v2116
        %v2118 = vand.u32 %v2117, 4294901760
        %2119 = vmatmul.mubr.f32.gmra.mrb[0].mxu0 %v2118
        %v2120 = vpop.f32.mrb[0].mxu0
        %v2121 = vadd.f32 %v1846, %v2120
        %v2122 = vpop.f32.mrb[0].mxu0
        %v2123 = vadd.f32 %v1848, %v2122
        %2124 = vmatprep.mubr.f32.mxu0 0.0
        %v2125 = vand.u32 %v1038, 4294901760
        %v2126 = vsub.f32 %v1038, %v2125
        %v2127 = vand.u32 %v2126, 4294901760
        %2128 = vmatmul.mubr.f32.gmra.mrb[0].mxu0 %v2127
        %v2129 = vpop.f32.mrb[0].mxu0
        %v2130 = vadd.f32 %v1854, %v2129
        %v2131 = vpop.f32.mrb[0].mxu0
        %v2132 = vadd.f32 %v1856, %v2131
        %2133 = vmatprep.mubr.f32.mxu0 0.0
        %v2134 = vand.u32 %v1041, 4294901760
        %v2135 = vsub.f32 %v1041, %v2134
        %v2136 = vand.u32 %v2135, 4294901760
        %2137 = vmatmul.mubr.f32.gmra.mrb[0].mxu0 %v2136
        %v2138 = vpop.f32.mrb[0].mxu0
        %v2139 = vadd.f32 %v1862, %v2138
        %v2140 = vpop.f32.mrb[0].mxu0
        %v2141 = vadd.f32 %v1864, %v2140
        %2142 = vmatprep.mubr.f32.mxu0 0.0
        %v2143 = vand.u32 %v1044, 4294901760
        %v2144 = vsub.f32 %v1044, %v2143
        %v2145 = vand.u32 %v2144, 4294901760
        %2146 = vmatmul.mubr.f32.gmra.mrb[0].mxu0 %v2145
        %v2147 = vpop.f32.mrb[0].mxu0
        %v2148 = vadd.f32 %v1870, %v2147
        %v2149 = vpop.f32.mrb[0].mxu0
        %v2150 = vadd.f32 %v1872, %v2149
        %2151 = vmatprep.mubr.f32.mxu0 0.0
        %v2152 = vand.u32 %v1047, 4294901760
        %v2153 = vsub.f32 %v1047, %v2152
        %v2154 = vand.u32 %v2153, 4294901760
        %2155 = vmatmul.mubr.f32.gmra.mrb[0].mxu0 %v2154
        %v2156 = vpop.f32.mrb[0].mxu0
        %v2157 = vadd.f32 %v1878, %v2156
        %v2158 = vpop.f32.mrb[0].mxu0
        %v2159 = vadd.f32 %v1880, %v2158
        %2160 = vmatprep.mubr.f32.mxu0 0.0
        %v2161 = vand.u32 %v1050, 4294901760
        %v2162 = vsub.f32 %v1050, %v2161
        %v2163 = vand.u32 %v2162, 4294901760
        %2164 = vmatmul.mubr.f32.gmra.mrb[0].mxu0 %v2163
        %v2165 = vpop.f32.mrb[0].mxu0
        %v2166 = vadd.f32 %v1886, %v2165
        %v2167 = vpop.f32.mrb[0].mxu0
        %v2168 = vadd.f32 %v1888, %v2167
        %2169 = vmatprep.mubr.f32.mxu0 0.0
        %v2170 = vand.u32 %v1053, 4294901760
        %v2171 = vsub.f32 %v1053, %v2170
        %v2172 = vand.u32 %v2171, 4294901760
        %2173 = vmatmul.mubr.f32.gmra.mrb[0].mxu0 %v2172
        %v2174 = vpop.f32.mrb[0].mxu0
        %v2175 = vadd.f32 %v1894, %v2174
        %v2176 = vpop.f32.mrb[0].mxu0
        %v2177 = vadd.f32 %v1896, %v2176
        %2178 = vmatprep.mubr.f32.mxu0 0.0
        %v2179 = vand.u32 %v1056, 4294901760
        %v2180 = vsub.f32 %v1056, %v2179
        %v2181 = vand.u32 %v2180, 4294901760
        %2182 = vmatmul.mubr.f32.gmra.mrb[0].mxu0 %v2181
        %v2183 = vpop.f32.mrb[0].mxu0
        %v2184 = vadd.f32 %v1902, %v2183
        %v2185 = vpop.f32.mrb[0].mxu0
        %v2186 = vadd.f32 %v1904, %v2185
        %2187 = vmatprep.mubr.f32.mxu0 0.0
        %v2188 = vand.u32 %v1059, 4294901760
        %v2189 = vsub.f32 %v1059, %v2188
        %v2190 = vand.u32 %v2189, 4294901760
        %2191 = vmatmul.mubr.f32.gmra.mrb[0].mxu0 %v2190
        %v2192 = vpop.f32.mrb[0].mxu0
        %v2193 = vadd.f32 %v1910, %v2192
        %v2194 = vpop.f32.mrb[0].mxu0
        %v2195 = vadd.f32 %v1912, %v2194
        %2196 = vmatprep.mubr.f32.mxu0 0.0
        %v2197 = vand.u32 %v1062, 4294901760
        %v2198 = vsub.f32 %v1062, %v2197
        %v2199 = vand.u32 %v2198, 4294901760
        %2200 = vmatmul.mubr.f32.gmra.mrb[0].mxu0 %v2199
        %v2201 = vpop.f32.mrb[0].mxu0
        %v2202 = vadd.f32 %v1918, %v2201
        %v2203 = vpop.f32.mrb[0].mxu0
        %v2204 = vadd.f32 %v1920, %v2203
        %2205 = vmatprep.mubr.f32.mxu0 0.0
        %v2206 = vand.u32 %v1065, 4294901760
        %v2207 = vsub.f32 %v1065, %v2206
        %v2208 = vand.u32 %v2207, 4294901760
        %2209 = vmatmul.mubr.f32.gmra.mrb[0].mxu0 %v2208
        %v2210 = vpop.f32.mrb[0].mxu0
        %v2211 = vadd.f32 %v1926, %v2210
        %v2212 = vpop.f32.mrb[0].mxu0
        %v2213 = vadd.f32 %v1928, %v2212
        %2214 = vmatprep.mubr.f32.mxu0 0.0
        %v2215 = vand.u32 %v1068, 4294901760
        %v2216 = vsub.f32 %v1068, %v2215
        %v2217 = vand.u32 %v2216, 4294901760
        %2218 = vmatmul.mubr.f32.gmra.mrb[0].mxu0 %v2217
        %v2219 = vpop.f32.mrb[0].mxu0
        %v2220 = vadd.f32 %v1934, %v2219
        %v2221 = vpop.f32.mrb[0].mxu0
        %v2222 = vadd.f32 %v1936, %v2221
        %2223 = vmatprep.mubr.f32.mxu0 0.0
        %v2224 = vand.u32 %v1071, 4294901760
        %v2225 = vsub.f32 %v1071, %v2224
        %v2226 = vand.u32 %v2225, 4294901760
        %2227 = vmatmul.mubr.f32.gmra.mrb[0].mxu0 %v2226
        %v2228 = vpop.f32.mrb[0].mxu0
        %v2229 = vadd.f32 %v1942, %v2228
        %v2230 = vpop.f32.mrb[0].mxu0
        %v2231 = vadd.f32 %v1944, %v2230
        %2232 = vmatprep.mubr.f32.mxu0 0.0
        %v2233 = vand.u32 %v1074, 4294901760
        %v2234 = vsub.f32 %v1074, %v2233
        %v2235 = vand.u32 %v2234, 4294901760
        %2236 = vmatmul.mubr.f32.gmra.mrb[0].mxu0 %v2235
        %v2237 = vpop.f32.mrb[0].mxu0
        %v2238 = vadd.f32 %v1950, %v2237
        %v2239 = vpop.f32.mrb[0].mxu0
        %v2240 = vadd.f32 %v1952, %v2239
        %2241 = vmatprep.mubr.f32.mxu0 0.0
        %v2242 = vand.u32 %v1077, 4294901760
        %v2243 = vsub.f32 %v1077, %v2242
        %v2244 = vand.u32 %v2243, 4294901760
        %2245 = vmatmul.mubr.f32.gmra.mrb[0].mxu0 %v2244
        %v2246 = vpop.f32.mrb[0].mxu0
        %v2247 = vadd.f32 %v1958, %v2246
        %v2248 = vpop.f32.mrb[0].mxu0
        %v2249 = vadd.f32 %v1960, %v2248
        %2250 = vdwg.mxu0
        %v2251 = vand.u32 %v999, 4294901760
        %v2252 = vsub.f32 %v999, %v2251
        %v2253 = vand.u32 %v2252, 4294901760
        %2254 = vmatprep.subr.mxu0 %v2253
        %v2255 = vand.u32 %v998, 4294901760
        %v2256 = vsub.f32 %v998, %v2255
        %v2257 = vand.u32 %v2256, 4294901760
        %2258 = vmatpush1.msra.mxu0 %v2257
        %v2259 = vand.u32 %v1001, 4294901760
        %v2260 = vsub.f32 %v1001, %v2259
        %v2261 = vand.u32 %v2260, 4294901760
        %2262 = vmatprep.subr.mxu0 %v2261
        %v2263 = vand.u32 %v1000, 4294901760
        %v2264 = vsub.f32 %v1000, %v2263
        %v2265 = vand.u32 %v2264, 4294901760
        %2266 = vmatpush1.msra.mxu0 %v2265
        %v2267 = vand.u32 %v1003, 4294901760
        %v2268 = vsub.f32 %v1003, %v2267
        %v2269 = vand.u32 %v2268, 4294901760
        %2270 = vmatprep.subr.mxu0 %v2269
        %v2271 = vand.u32 %v1002, 4294901760
        %v2272 = vsub.f32 %v1002, %v2271
        %v2273 = vand.u32 %v2272, 4294901760
        %2274 = vmatpush1.msra.mxu0 %v2273
        %v2275 = vand.u32 %v1005, 4294901760
        %v2276 = vsub.f32 %v1005, %v2275
        %v2277 = vand.u32 %v2276, 4294901760
        %2278 = vmatprep.subr.mxu0 %v2277
        %v2279 = vand.u32 %v1004, 4294901760
        %v2280 = vsub.f32 %v1004, %v2279
        %v2281 = vand.u32 %v2280, 4294901760
        %2282 = vmatpush1.msra.mxu0 %v2281
        %2283 = vmatprep.subr.mxu0 0.0
        %2284 = vmatpush1.msra.mxu0 0.0
        %2285 = vmatprep.subr.mxu0 0.0
        %2286 = vmatpush1.msra.mxu0 0.0
        %2287 = vmatprep.subr.mxu0 0.0
        %2288 = vmatpush1.msra.mxu0 0.0
        %2289 = vmatprep.subr.mxu0 0.0
        %2290 = vmatpush1.msra.mxu0 0.0
        %2291 = vmatprep.subr.mxu0 0.0
        %2292 = vmatpush1.msra.mxu0 0.0
        %2293 = vmatprep.subr.mxu0 0.0
        %2294 = vmatpush1.msra.mxu0 0.0
        %2295 = vmatprep.subr.mxu0 0.0
        %2296 = vmatpush1.msra.mxu0 0.0
        %2297 = vmatprep.subr.mxu0 0.0
        %2298 = vmatpush1.msra.mxu0 0.0
        %2299 = vmatprep.subr.mxu0 0.0
        %2300 = vmatpush1.msra.mxu0 0.0
        %2301 = vmatprep.subr.mxu0 0.0
        %2302 = vmatpush1.msra.mxu0 0.0
        %2303 = vmatprep.subr.mxu0 0.0
        %2304 = vmatpush1.msra.mxu0 0.0
        %2305 = vmatprep.subr.mxu0 0.0
        %2306 = vmatpush1.msra.mxu0 0.0
        %2307 = vmatprep.subr.mxu0 0.0
        %2308 = vmatpush1.msra.mxu0 0.0
        %2309 = vmatprep.subr.mxu0 0.0
        %2310 = vmatpush1.msra.mxu0 0.0
        %2311 = vmatprep.subr.mxu0 0.0
        %2312 = vmatpush1.msra.mxu0 0.0
        %2313 = vmatprep.subr.mxu0 0.0
        %2314 = vmatpush1.msra.mxu0 0.0
        %2315 = vmatprep.subr.mxu0 0.0
        %2316 = vmatpush1.msra.mxu0 0.0
        %2317 = vmatprep.subr.mxu0 0.0
        %2318 = vmatpush1.msra.mxu0 0.0
        %2319 = vmatprep.subr.mxu0 0.0
        %2320 = vmatpush1.msra.mxu0 0.0
        %2321 = vmatprep.subr.mxu0 0.0
        %2322 = vmatpush1.msra.mxu0 0.0
        %2323 = vmatprep.subr.mxu0 0.0
        %2324 = vmatpush1.msra.mxu0 0.0
        %2325 = vmatprep.subr.mxu0 0.0
        %2326 = vmatpush1.msra.mxu0 0.0
        %2327 = vmatprep.subr.mxu0 0.0
        %2328 = vmatpush1.msra.mxu0 0.0
        %2329 = vmatprep.subr.mxu0 0.0
        %2330 = vmatpush1.msra.mxu0 0.0
        %2331 = vmatprep.subr.mxu0 0.0
        %2332 = vmatpush1.msra.mxu0 0.0
        %2333 = vmatprep.subr.mxu0 0.0
        %2334 = vmatpush1.msra.mxu0 0.0
        %2335 = vmatprep.subr.mxu0 0.0
        %2336 = vmatpush1.msra.mxu0 0.0
        %2337 = vmatprep.subr.mxu0 0.0
        %2338 = vmatpush1.msra.mxu0 0.0
        %2339 = vmatprep.mubr.f32.mxu0 0.0
        %v2340 = vand.u32 %v1008, 4294901760
        %2341 = vmatmul.mubr.f32.gmra.mrb[0].mxu0 %v2340
        %v2342 = vpop.f32.mrb[0].mxu0
        %v2343 = vadd.f32 %v2040, %v2342
        %v2344 = vpop.f32.mrb[0].mxu0
        %v2345 = vadd.f32 %v2042, %v2344
        %2346 = vmatprep.mubr.f32.mxu0 0.0
        %v2347 = vand.u32 %v1011, 4294901760
        %2348 = vmatmul.mubr.f32.gmra.mrb[0].mxu0 %v2347
        %v2349 = vpop.f32.mrb[0].mxu0
        %v2350 = vadd.f32 %v2049, %v2349
        %v2351 = vpop.f32.mrb[0].mxu0
        %v2352 = vadd.f32 %v2051, %v2351
        %2353 = vmatprep.mubr.f32.mxu0 0.0
        %v2354 = vand.u32 %v1014, 4294901760
        %2355 = vmatmul.mubr.f32.gmra.mrb[0].mxu0 %v2354
        %v2356 = vpop.f32.mrb[0].mxu0
        %v2357 = vadd.f32 %v2058, %v2356
        %v2358 = vpop.f32.mrb[0].mxu0
        %v2359 = vadd.f32 %v2060, %v2358
        %2360 = vmatprep.mubr.f32.mxu0 0.0
        %v2361 = vand.u32 %v1017, 4294901760
        %2362 = vmatmul.mubr.f32.gmra.mrb[0].mxu0 %v2361
        %v2363 = vpop.f32.mrb[0].mxu0
        %v2364 = vadd.f32 %v2067, %v2363
        %v2365 = vpop.f32.mrb[0].mxu0
        %v2366 = vadd.f32 %v2069, %v2365
        %2367 = vmatprep.mubr.f32.mxu0 0.0
        %v2368 = vand.u32 %v1020, 4294901760
        %2369 = vmatmul.mubr.f32.gmra.mrb[0].mxu0 %v2368
        %v2370 = vpop.f32.mrb[0].mxu0
        %v2371 = vadd.f32 %v2076, %v2370
        %v2372 = vpop.f32.mrb[0].mxu0
        %v2373 = vadd.f32 %v2078, %v2372
        %2374 = vmatprep.mubr.f32.mxu0 0.0
        %v2375 = vand.u32 %v1023, 4294901760
        %2376 = vmatmul.mubr.f32.gmra.mrb[0].mxu0 %v2375
        %v2377 = vpop.f32.mrb[0].mxu0
        %v2378 = vadd.f32 %v2085, %v2377
        %v2379 = vpop.f32.mrb[0].mxu0
        %v2380 = vadd.f32 %v2087, %v2379
        %2381 = vmatprep.mubr.f32.mxu0 0.0
        %v2382 = vand.u32 %v1026, 4294901760
        %2383 = vmatmul.mubr.f32.gmra.mrb[0].mxu0 %v2382
        %v2384 = vpop.f32.mrb[0].mxu0
        %v2385 = vadd.f32 %v2094, %v2384
        %v2386 = vpop.f32.mrb[0].mxu0
        %v2387 = vadd.f32 %v2096, %v2386
        %2388 = vmatprep.mubr.f32.mxu0 0.0
        %v2389 = vand.u32 %v1029, 4294901760
        %2390 = vmatmul.mubr.f32.gmra.mrb[0].mxu0 %v2389
        %v2391 = vpop.f32.mrb[0].mxu0
        %v2392 = vadd.f32 %v2103, %v2391
        %v2393 = vpop.f32.mrb[0].mxu0
        %v2394 = vadd.f32 %v2105, %v2393
        %2395 = vmatprep.mubr.f32.mxu0 0.0
        %v2396 = vand.u32 %v1032, 4294901760
        %2397 = vmatmul.mubr.f32.gmra.mrb[0].mxu0 %v2396
        %v2398 = vpop.f32.mrb[0].mxu0
        %v2399 = vadd.f32 %v2112, %v2398
        %v2400 = vpop.f32.mrb[0].mxu0
        %v2401 = vadd.f32 %v2114, %v2400
        %2402 = vmatprep.mubr.f32.mxu0 0.0
        %v2403 = vand.u32 %v1035, 4294901760
        %2404 = vmatmul.mubr.f32.gmra.mrb[0].mxu0 %v2403
        %v2405 = vpop.f32.mrb[0].mxu0
        %v2406 = vadd.f32 %v2121, %v2405
        %v2407 = vpop.f32.mrb[0].mxu0
        %v2408 = vadd.f32 %v2123, %v2407
        %2409 = vmatprep.mubr.f32.mxu0 0.0
        %v2410 = vand.u32 %v1038, 4294901760
        %2411 = vmatmul.mubr.f32.gmra.mrb[0].mxu0 %v2410
        %v2412 = vpop.f32.mrb[0].mxu0
        %v2413 = vadd.f32 %v2130, %v2412
        %v2414 = vpop.f32.mrb[0].mxu0
        %v2415 = vadd.f32 %v2132, %v2414
        %2416 = vmatprep.mubr.f32.mxu0 0.0
        %v2417 = vand.u32 %v1041, 4294901760
        %2418 = vmatmul.mubr.f32.gmra.mrb[0].mxu0 %v2417
        %v2419 = vpop.f32.mrb[0].mxu0
        %v2420 = vadd.f32 %v2139, %v2419
        %v2421 = vpop.f32.mrb[0].mxu0
        %v2422 = vadd.f32 %v2141, %v2421
        %2423 = vmatprep.mubr.f32.mxu0 0.0
        %v2424 = vand.u32 %v1044, 4294901760
        %2425 = vmatmul.mubr.f32.gmra.mrb[0].mxu0 %v2424
        %v2426 = vpop.f32.mrb[0].mxu0
        %v2427 = vadd.f32 %v2148, %v2426
        %v2428 = vpop.f32.mrb[0].mxu0
        %v2429 = vadd.f32 %v2150, %v2428
        %2430 = vmatprep.mubr.f32.mxu0 0.0
        %v2431 = vand.u32 %v1047, 4294901760
        %2432 = vmatmul.mubr.f32.gmra.mrb[0].mxu0 %v2431
        %v2433 = vpop.f32.mrb[0].mxu0
        %v2434 = vadd.f32 %v2157, %v2433
        %v2435 = vpop.f32.mrb[0].mxu0
        %v2436 = vadd.f32 %v2159, %v2435
        %2437 = vmatprep.mubr.f32.mxu0 0.0
        %v2438 = vand.u32 %v1050, 4294901760
        %2439 = vmatmul.mubr.f32.gmra.mrb[0].mxu0 %v2438
        %v2440 = vpop.f32.mrb[0].mxu0
        %v2441 = vadd.f32 %v2166, %v2440
        %v2442 = vpop.f32.mrb[0].mxu0
        %v2443 = vadd.f32 %v2168, %v2442
        %2444 = vmatprep.mubr.f32.mxu0 0.0
        %v2445 = vand.u32 %v1053, 4294901760
        %2446 = vmatmul.mubr.f32.gmra.mrb[0].mxu0 %v2445
        %v2447 = vpop.f32.mrb[0].mxu0
        %v2448 = vadd.f32 %v2175, %v2447
        %v2449 = vpop.f32.mrb[0].mxu0
        %v2450 = vadd.f32 %v2177, %v2449
        %2451 = vmatprep.mubr.f32.mxu0 0.0
        %v2452 = vand.u32 %v1056, 4294901760
        %2453 = vmatmul.mubr.f32.gmra.mrb[0].mxu0 %v2452
        %v2454 = vpop.f32.mrb[0].mxu0
        %v2455 = vadd.f32 %v2184, %v2454
        %v2456 = vpop.f32.mrb[0].mxu0
        %v2457 = vadd.f32 %v2186, %v2456
        %2458 = vmatprep.mubr.f32.mxu0 0.0
        %v2459 = vand.u32 %v1059, 4294901760
        %2460 = vmatmul.mubr.f32.gmra.mrb[0].mxu0 %v2459
        %v2461 = vpop.f32.mrb[0].mxu0
        %v2462 = vadd.f32 %v2193, %v2461
        %v2463 = vpop.f32.mrb[0].mxu0
        %v2464 = vadd.f32 %v2195, %v2463
        %2465 = vmatprep.mubr.f32.mxu0 0.0
        %v2466 = vand.u32 %v1062, 4294901760
        %2467 = vmatmul.mubr.f32.gmra.mrb[0].mxu0 %v2466
        %v2468 = vpop.f32.mrb[0].mxu0
        %v2469 = vadd.f32 %v2202, %v2468
        %v2470 = vpop.f32.mrb[0].mxu0
        %v2471 = vadd.f32 %v2204, %v2470
        %2472 = vmatprep.mubr.f32.mxu0 0.0
        %v2473 = vand.u32 %v1065, 4294901760
        %2474 = vmatmul.mubr.f32.gmra.mrb[0].mxu0 %v2473
        %v2475 = vpop.f32.mrb[0].mxu0
        %v2476 = vadd.f32 %v2211, %v2475
        %v2477 = vpop.f32.mrb[0].mxu0
        %v2478 = vadd.f32 %v2213, %v2477
        %2479 = vmatprep.mubr.f32.mxu0 0.0
        %v2480 = vand.u32 %v1068, 4294901760
        %2481 = vmatmul.mubr.f32.gmra.mrb[0].mxu0 %v2480
        %v2482 = vpop.f32.mrb[0].mxu0
        %v2483 = vadd.f32 %v2220, %v2482
        %v2484 = vpop.f32.mrb[0].mxu0
        %v2485 = vadd.f32 %v2222, %v2484
        %2486 = vmatprep.mubr.f32.mxu0 0.0
        %v2487 = vand.u32 %v1071, 4294901760
        %2488 = vmatmul.mubr.f32.gmra.mrb[0].mxu0 %v2487
        %v2489 = vpop.f32.mrb[0].mxu0
        %v2490 = vadd.f32 %v2229, %v2489
        %v2491 = vpop.f32.mrb[0].mxu0
        %v2492 = vadd.f32 %v2231, %v2491
        %2493 = vmatprep.mubr.f32.mxu0 0.0
        %v2494 = vand.u32 %v1074, 4294901760
        %2495 = vmatmul.mubr.f32.gmra.mrb[0].mxu0 %v2494
        %v2496 = vpop.f32.mrb[0].mxu0
        %v2497 = vadd.f32 %v2238, %v2496
        %v2498 = vpop.f32.mrb[0].mxu0
        %v2499 = vadd.f32 %v2240, %v2498
        %2500 = vmatprep.mubr.f32.mxu0 0.0
        %v2501 = vand.u32 %v1077, 4294901760
        %2502 = vmatmul.mubr.f32.gmra.mrb[0].mxu0 %v2501
        %v2503 = vpop.f32.mrb[0].mxu0
        %v2504 = vadd.f32 %v2247, %v2503
        %v2505 = vpop.f32.mrb[0].mxu0
        %v2506 = vadd.f32 %v2249, %v2505
        %2507 = vdwg.mxu0
        %v2508 = vand.u32 %v999, 4294901760
        %2509 = vmatprep.subr.mxu0 %v2508
        %v2510 = vand.u32 %v998, 4294901760
        %2511 = vmatpush1.msra.mxu0 %v2510
        %v2512 = vand.u32 %v1001, 4294901760
        %2513 = vmatprep.subr.mxu0 %v2512
        %v2514 = vand.u32 %v1000, 4294901760
        %2515 = vmatpush1.msra.mxu0 %v2514
        %v2516 = vand.u32 %v1003, 4294901760
        %2517 = vmatprep.subr.mxu0 %v2516
        %v2518 = vand.u32 %v1002, 4294901760
        %2519 = vmatpush1.msra.mxu0 %v2518
        %v2520 = vand.u32 %v1005, 4294901760
        %2521 = vmatprep.subr.mxu0 %v2520
        %v2522 = vand.u32 %v1004, 4294901760
        %2523 = vmatpush1.msra.mxu0 %v2522
        %2524 = vmatprep.subr.mxu0 0.0
        %2525 = vmatpush1.msra.mxu0 0.0
        %2526 = vmatprep.subr.mxu0 0.0
        %2527 = vmatpush1.msra.mxu0 0.0
        %2528 = vmatprep.subr.mxu0 0.0
        %2529 = vmatpush1.msra.mxu0 0.0
        %2530 = vmatprep.subr.mxu0 0.0
        %2531 = vmatpush1.msra.mxu0 0.0
        %2532 = vmatprep.subr.mxu0 0.0
        %2533 = vmatpush1.msra.mxu0 0.0
        %2534 = vmatprep.subr.mxu0 0.0
        %2535 = vmatpush1.msra.mxu0 0.0
        %2536 = vmatprep.subr.mxu0 0.0
        %2537 = vmatpush1.msra.mxu0 0.0
        %2538 = vmatprep.subr.mxu0 0.0
        %2539 = vmatpush1.msra.mxu0 0.0
        %2540 = vmatprep.subr.mxu0 0.0
        %2541 = vmatpush1.msra.mxu0 0.0
        %2542 = vmatprep.subr.mxu0 0.0
        %2543 = vmatpush1.msra.mxu0 0.0
        %2544 = vmatprep.subr.mxu0 0.0
        %2545 = vmatpush1.msra.mxu0 0.0
        %2546 = vmatprep.subr.mxu0 0.0
        %2547 = vmatpush1.msra.mxu0 0.0
        %2548 = vmatprep.subr.mxu0 0.0
        %2549 = vmatpush1.msra.mxu0 0.0
        %2550 = vmatprep.subr.mxu0 0.0
        %2551 = vmatpush1.msra.mxu0 0.0
        %2552 = vmatprep.subr.mxu0 0.0
        %2553 = vmatpush1.msra.mxu0 0.0
        %2554 = vmatprep.subr.mxu0 0.0
        %2555 = vmatpush1.msra.mxu0 0.0
        %2556 = vmatprep.subr.mxu0 0.0
        %2557 = vmatpush1.msra.mxu0 0.0
        %2558 = vmatprep.subr.mxu0 0.0
        %2559 = vmatpush1.msra.mxu0 0.0
        %2560 = vmatprep.subr.mxu0 0.0
        %2561 = vmatpush1.msra.mxu0 0.0
        %2562 = vmatprep.subr.mxu0 0.0
        %2563 = vmatpush1.msra.mxu0 0.0
        %2564 = vmatprep.subr.mxu0 0.0
        %2565 = vmatpush1.msra.mxu0 0.0
        %2566 = vmatprep.subr.mxu0 0.0
        %2567 = vmatpush1.msra.mxu0 0.0
        %2568 = vmatprep.subr.mxu0 0.0
        %2569 = vmatpush1.msra.mxu0 0.0
        %2570 = vmatprep.subr.mxu0 0.0
        %2571 = vmatpush1.msra.mxu0 0.0
        %2572 = vmatprep.subr.mxu0 0.0
        %2573 = vmatpush1.msra.mxu0 0.0
        %2574 = vmatprep.subr.mxu0 0.0
        %2575 = vmatpush1.msra.mxu0 0.0
        %2576 = vmatprep.subr.mxu0 0.0
        %2577 = vmatpush1.msra.mxu0 0.0
        %2578 = vmatprep.subr.mxu0 0.0
        %2579 = vmatpush1.msra.mxu0 0.0
        %2580 = vmatprep.mubr.f32.mxu0 0.0
        %v2581 = vand.u32 %v1008, 4294901760
        %2582 = vmatmul.mubr.f32.gmra.mrb[0].mxu0 %v2581
        %v2583 = vpop.f32.mrb[0].mxu0
        %v2584 = vadd.f32 %v2343, %v2583
        %v2585 = vpop.f32.mrb[0].mxu0
        %v2586 = vadd.f32 %v2345, %v2585
        %2587 = vmatprep.mubr.f32.mxu0 0.0
        %v2588 = vand.u32 %v1011, 4294901760
        %2589 = vmatmul.mubr.f32.gmra.mrb[0].mxu0 %v2588
        %v2590 = vpop.f32.mrb[0].mxu0
        %v2591 = vadd.f32 %v2350, %v2590
        %v2592 = vpop.f32.mrb[0].mxu0
        %v2593 = vadd.f32 %v2352, %v2592
        %2594 = vmatprep.mubr.f32.mxu0 0.0
        %v2595 = vand.u32 %v1014, 4294901760
        %2596 = vmatmul.mubr.f32.gmra.mrb[0].mxu0 %v2595
        %v2597 = vpop.f32.mrb[0].mxu0
        %v2598 = vadd.f32 %v2357, %v2597
        %v2599 = vpop.f32.mrb[0].mxu0
        %v2600 = vadd.f32 %v2359, %v2599
        %2601 = vmatprep.mubr.f32.mxu0 0.0
        %v2602 = vand.u32 %v1017, 4294901760
        %2603 = vmatmul.mubr.f32.gmra.mrb[0].mxu0 %v2602
        %v2604 = vpop.f32.mrb[0].mxu0
        %v2605 = vadd.f32 %v2364, %v2604
        %v2606 = vpop.f32.mrb[0].mxu0
        %v2607 = vadd.f32 %v2366, %v2606
        %2608 = vmatprep.mubr.f32.mxu0 0.0
        %v2609 = vand.u32 %v1020, 4294901760
        %2610 = vmatmul.mubr.f32.gmra.mrb[0].mxu0 %v2609
        %v2611 = vpop.f32.mrb[0].mxu0
        %v2612 = vadd.f32 %v2371, %v2611
        %v2613 = vpop.f32.mrb[0].mxu0
        %v2614 = vadd.f32 %v2373, %v2613
        %2615 = vmatprep.mubr.f32.mxu0 0.0
        %v2616 = vand.u32 %v1023, 4294901760
        %2617 = vmatmul.mubr.f32.gmra.mrb[0].mxu0 %v2616
        %v2618 = vpop.f32.mrb[0].mxu0
        %v2619 = vadd.f32 %v2378, %v2618
        %v2620 = vpop.f32.mrb[0].mxu0
        %v2621 = vadd.f32 %v2380, %v2620
        %2622 = vmatprep.mubr.f32.mxu0 0.0
        %v2623 = vand.u32 %v1026, 4294901760
        %2624 = vmatmul.mubr.f32.gmra.mrb[0].mxu0 %v2623
        %v2625 = vpop.f32.mrb[0].mxu0
        %v2626 = vadd.f32 %v2385, %v2625
        %v2627 = vpop.f32.mrb[0].mxu0
        %v2628 = vadd.f32 %v2387, %v2627
        %2629 = vmatprep.mubr.f32.mxu0 0.0
        %v2630 = vand.u32 %v1029, 4294901760
        %2631 = vmatmul.mubr.f32.gmra.mrb[0].mxu0 %v2630
        %v2632 = vpop.f32.mrb[0].mxu0
        %v2633 = vadd.f32 %v2392, %v2632
        %v2634 = vpop.f32.mrb[0].mxu0
        %v2635 = vadd.f32 %v2394, %v2634
        %2636 = vmatprep.mubr.f32.mxu0 0.0
        %v2637 = vand.u32 %v1032, 4294901760
        %2638 = vmatmul.mubr.f32.gmra.mrb[0].mxu0 %v2637
        %v2639 = vpop.f32.mrb[0].mxu0
        %v2640 = vadd.f32 %v2399, %v2639
        %v2641 = vpop.f32.mrb[0].mxu0
        %v2642 = vadd.f32 %v2401, %v2641
        %2643 = vmatprep.mubr.f32.mxu0 0.0
        %v2644 = vand.u32 %v1035, 4294901760
        %2645 = vmatmul.mubr.f32.gmra.mrb[0].mxu0 %v2644
        %v2646 = vpop.f32.mrb[0].mxu0
        %v2647 = vadd.f32 %v2406, %v2646
        %v2648 = vpop.f32.mrb[0].mxu0
        %v2649 = vadd.f32 %v2408, %v2648
        %2650 = vmatprep.mubr.f32.mxu0 0.0
        %v2651 = vand.u32 %v1038, 4294901760
        %2652 = vmatmul.mubr.f32.gmra.mrb[0].mxu0 %v2651
        %v2653 = vpop.f32.mrb[0].mxu0
        %v2654 = vadd.f32 %v2413, %v2653
        %v2655 = vpop.f32.mrb[0].mxu0
        %v2656 = vadd.f32 %v2415, %v2655
        %2657 = vmatprep.mubr.f32.mxu0 0.0
        %v2658 = vand.u32 %v1041, 4294901760
        %2659 = vmatmul.mubr.f32.gmra.mrb[0].mxu0 %v2658
        %v2660 = vpop.f32.mrb[0].mxu0
        %v2661 = vadd.f32 %v2420, %v2660
        %v2662 = vpop.f32.mrb[0].mxu0
        %v2663 = vadd.f32 %v2422, %v2662
        %2664 = vmatprep.mubr.f32.mxu0 0.0
        %v2665 = vand.u32 %v1044, 4294901760
        %2666 = vmatmul.mubr.f32.gmra.mrb[0].mxu0 %v2665
        %v2667 = vpop.f32.mrb[0].mxu0
        %v2668 = vadd.f32 %v2427, %v2667
        %v2669 = vpop.f32.mrb[0].mxu0
        %v2670 = vadd.f32 %v2429, %v2669
        %2671 = vmatprep.mubr.f32.mxu0 0.0
        %v2672 = vand.u32 %v1047, 4294901760
        %2673 = vmatmul.mubr.f32.gmra.mrb[0].mxu0 %v2672
        %v2674 = vpop.f32.mrb[0].mxu0
        %v2675 = vadd.f32 %v2434, %v2674
        %v2676 = vpop.f32.mrb[0].mxu0
        %v2677 = vadd.f32 %v2436, %v2676
        %2678 = vmatprep.mubr.f32.mxu0 0.0
        %v2679 = vand.u32 %v1050, 4294901760
        %2680 = vmatmul.mubr.f32.gmra.mrb[0].mxu0 %v2679
        %v2681 = vpop.f32.mrb[0].mxu0
        %v2682 = vadd.f32 %v2441, %v2681
        %v2683 = vpop.f32.mrb[0].mxu0
        %v2684 = vadd.f32 %v2443, %v2683
        %2685 = vmatprep.mubr.f32.mxu0 0.0
        %v2686 = vand.u32 %v1053, 4294901760
        %2687 = vmatmul.mubr.f32.gmra.mrb[0].mxu0 %v2686
        %v2688 = vpop.f32.mrb[0].mxu0
        %v2689 = vadd.f32 %v2448, %v2688
        %v2690 = vpop.f32.mrb[0].mxu0
        %v2691 = vadd.f32 %v2450, %v2690
        %2692 = vmatprep.mubr.f32.mxu0 0.0
        %v2693 = vand.u32 %v1056, 4294901760
        %2694 = vmatmul.mubr.f32.gmra.mrb[0].mxu0 %v2693
        %v2695 = vpop.f32.mrb[0].mxu0
        %v2696 = vadd.f32 %v2455, %v2695
        %v2697 = vpop.f32.mrb[0].mxu0
        %v2698 = vadd.f32 %v2457, %v2697
        %2699 = vmatprep.mubr.f32.mxu0 0.0
        %v2700 = vand.u32 %v1059, 4294901760
        %2701 = vmatmul.mubr.f32.gmra.mrb[0].mxu0 %v2700
        %v2702 = vpop.f32.mrb[0].mxu0
        %v2703 = vadd.f32 %v2462, %v2702
        %v2704 = vpop.f32.mrb[0].mxu0
        %v2705 = vadd.f32 %v2464, %v2704
        %2706 = vmatprep.mubr.f32.mxu0 0.0
        %v2707 = vand.u32 %v1062, 4294901760
        %2708 = vmatmul.mubr.f32.gmra.mrb[0].mxu0 %v2707
        %v2709 = vpop.f32.mrb[0].mxu0
        %v2710 = vadd.f32 %v2469, %v2709
        %v2711 = vpop.f32.mrb[0].mxu0
        %v2712 = vadd.f32 %v2471, %v2711
        %2713 = vmatprep.mubr.f32.mxu0 0.0
        %v2714 = vand.u32 %v1065, 4294901760
        %2715 = vmatmul.mubr.f32.gmra.mrb[0].mxu0 %v2714
        %v2716 = vpop.f32.mrb[0].mxu0
        %v2717 = vadd.f32 %v2476, %v2716
        %v2718 = vpop.f32.mrb[0].mxu0
        %v2719 = vadd.f32 %v2478, %v2718
        %2720 = vmatprep.mubr.f32.mxu0 0.0
        %v2721 = vand.u32 %v1068, 4294901760
        %2722 = vmatmul.mubr.f32.gmra.mrb[0].mxu0 %v2721
        %v2723 = vpop.f32.mrb[0].mxu0
        %v2724 = vadd.f32 %v2483, %v2723
        %v2725 = vpop.f32.mrb[0].mxu0
        %v2726 = vadd.f32 %v2485, %v2725
        %2727 = vmatprep.mubr.f32.mxu0 0.0
        %v2728 = vand.u32 %v1071, 4294901760
        %2729 = vmatmul.mubr.f32.gmra.mrb[0].mxu0 %v2728
        %v2730 = vpop.f32.mrb[0].mxu0
        %v2731 = vadd.f32 %v2490, %v2730
        %v2732 = vpop.f32.mrb[0].mxu0
        %v2733 = vadd.f32 %v2492, %v2732
        %2734 = vmatprep.mubr.f32.mxu0 0.0
        %v2735 = vand.u32 %v1074, 4294901760
        %2736 = vmatmul.mubr.f32.gmra.mrb[0].mxu0 %v2735
        %v2737 = vpop.f32.mrb[0].mxu0
        %v2738 = vadd.f32 %v2497, %v2737
        %v2739 = vpop.f32.mrb[0].mxu0
        %v2740 = vadd.f32 %v2499, %v2739
        %2741 = vmatprep.mubr.f32.mxu0 0.0
        %v2742 = vand.u32 %v1077, 4294901760
        %2743 = vmatmul.mubr.f32.gmra.mrb[0].mxu0 %v2742
        %v2744 = vpop.f32.mrb[0].mxu0
        %v2745 = vadd.f32 %v2504, %v2744
        %v2746 = vpop.f32.mrb[0].mxu0
        %v2747 = vadd.f32 %v2506, %v2746
        %2748 = vdwg.mxu0
        %v2749 = vmul.f32 %v926, %v2584
        %v2750 = vmul.f32 %v927, %v2586
        %v2751 = vmul.f32 %v928, %v2591
        %v2752 = vmul.f32 %v929, %v2593
        %v2753 = vmul.f32 %v930, %v2598
        %v2754 = vmul.f32 %v931, %v2600
        %v2755 = vmul.f32 %v932, %v2605
        %v2756 = vmul.f32 %v933, %v2607
        %v2757 = vmul.f32 %v934, %v2612
        %v2758 = vmul.f32 %v935, %v2614
        %v2759 = vmul.f32 %v936, %v2619
        %v2760 = vmul.f32 %v937, %v2621
        %v2761 = vmul.f32 %v938, %v2626
        %v2762 = vmul.f32 %v939, %v2628
        %v2763 = vmul.f32 %v940, %v2633
        %v2764 = vmul.f32 %v941, %v2635
        %v2765 = vmul.f32 %v942, %v2640
        %v2766 = vmul.f32 %v943, %v2642
        %v2767 = vmul.f32 %v944, %v2647
        %v2768 = vmul.f32 %v945, %v2649
        %v2769 = vmul.f32 %v946, %v2654
        %v2770 = vmul.f32 %v947, %v2656
        %v2771 = vmul.f32 %v948, %v2661
        %v2772 = vmul.f32 %v949, %v2663
        %v2773 = vmul.f32 %v950, %v2668
        %v2774 = vmul.f32 %v951, %v2670
        %v2775 = vmul.f32 %v952, %v2675
        %v2776 = vmul.f32 %v953, %v2677
        %v2777 = vmul.f32 %v954, %v2682
        %v2778 = vmul.f32 %v955, %v2684
        %v2779 = vmul.f32 %v956, %v2689
        %v2780 = vmul.f32 %v957, %v2691
        %v2781 = vmul.f32 %v958, %v2696
        %v2782 = vmul.f32 %v959, %v2698
        %v2783 = vmul.f32 %v960, %v2703
        %v2784 = vmul.f32 %v961, %v2705
        %v2785 = vmul.f32 %v962, %v2710
        %v2786 = vmul.f32 %v963, %v2712
        %v2787 = vmul.f32 %v964, %v2717
        %v2788 = vmul.f32 %v965, %v2719
        %v2789 = vmul.f32 %v966, %v2724
        %v2790 = vmul.f32 %v967, %v2726
        %v2791 = vmul.f32 %v968, %v2731
        %v2792 = vmul.f32 %v969, %v2733
        %v2793 = vmul.f32 %v970, %v2738
        %v2794 = vmul.f32 %v971, %v2740
        %v2795 = vmul.f32 %v972, %v2745
        %v2796 = vmul.f32 %v973, %v2747
        %2797 = vst [vmem:[%s353] sm:$0xff] %v2749
        %2798 = vst [vmem:[%s353 + $0x8] sm:$0xff] %v2750
        %2799 = vst [vmem:[%s353 + $0x10] sm:$0xff] %v2751
        %2800 = vst [vmem:[%s353 + $0x18] sm:$0xff] %v2752
        %2801 = vst [vmem:[%s353 + $0x20] sm:$0xff] %v2753
        %2802 = vst [vmem:[%s353 + $0x28] sm:$0xff] %v2754
        %2803 = vst [vmem:[%s353 + $0x30] sm:$0xff] %v2755
        %2804 = vst [vmem:[%s353 + $0x38] sm:$0xff] %v2756
        %2805 = vst [vmem:[%s353 + $0x40] sm:$0xff] %v2757
        %2806 = vst [vmem:[%s353 + $0x48] sm:$0xff] %v2758
        %2807 = vst [vmem:[%s353 + $0x50] sm:$0xff] %v2759
        %2808 = vst [vmem:[%s353 + $0x58] sm:$0xff] %v2760
        %2809 = vst [vmem:[%s353 + $0x60] sm:$0xff] %v2761
        %2810 = vst [vmem:[%s353 + $0x68] sm:$0xff] %v2762
        %2811 = vst [vmem:[%s353 + $0x70] sm:$0xff] %v2763
        %2812 = vst [vmem:[%s353 + $0x78] sm:$0xff] %v2764
        %2813 = vst [vmem:[%s353 + $0x80] sm:$0xff] %v2765
        %2814 = vst [vmem:[%s353 + $0x88] sm:$0xff] %v2766
        %2815 = vst [vmem:[%s353 + $0x90] sm:$0xff] %v2767
        %2816 = vst [vmem:[%s353 + $0x98] sm:$0xff] %v2768
        %2817 = vst [vmem:[%s353 + $0xa0] sm:$0xff] %v2769
        %2818 = vst [vmem:[%s353 + $0xa8] sm:$0xff] %v2770
        %2819 = vst [vmem:[%s353 + $0xb0] sm:$0xff] %v2771
        %2820 = vst [vmem:[%s353 + $0xb8] sm:$0xff] %v2772
        %2821 = vst [vmem:[%s353 + $0xc0] sm:$0xff] %v2773
        %2822 = vst [vmem:[%s353 + $0xc8] sm:$0xff] %v2774
        %2823 = vst [vmem:[%s353 + $0xd0] sm:$0xff] %v2775
        %2824 = vst [vmem:[%s353 + $0xd8] sm:$0xff] %v2776
        %2825 = vst [vmem:[%s353 + $0xe0] sm:$0xff] %v2777
        %2826 = vst [vmem:[%s353 + $0xe8] sm:$0xff] %v2778
        %2827 = vst [vmem:[%s353 + $0xf0] sm:$0xff] %v2779
        %2828 = vst [vmem:[%s353 + $0xf8] sm:$0xff] %v2780
        %2829 = vst [vmem:[%s353 + $0x100] sm:$0xff] %v2781
        %2830 = vst [vmem:[%s353 + $0x108] sm:$0xff] %v2782
        %2831 = vst [vmem:[%s353 + $0x110] sm:$0xff] %v2783
        %2832 = vst [vmem:[%s353 + $0x118] sm:$0xff] %v2784
        %2833 = vst [vmem:[%s353 + $0x120] sm:$0xff] %v2785
        %2834 = vst [vmem:[%s353 + $0x128] sm:$0xff] %v2786
        %2835 = vst [vmem:[%s353 + $0x130] sm:$0xff] %v2787
        %2836 = vst [vmem:[%s353 + $0x138] sm:$0xff] %v2788
        %2837 = vst [vmem:[%s353 + $0x140] sm:$0xff] %v2789
        %2838 = vst [vmem:[%s353 + $0x148] sm:$0xff] %v2790
        %2839 = vst [vmem:[%s353 + $0x150] sm:$0xff] %v2791
        %2840 = vst [vmem:[%s353 + $0x158] sm:$0xff] %v2792
        %2841 = vst [vmem:[%s353 + $0x160] sm:$0xff] %v2793
        %2842 = vst [vmem:[%s353 + $0x168] sm:$0xff] %v2794
        %2843 = vst [vmem:[%s353 + $0x170] sm:$0xff] %v2795
        %2844 = vst [vmem:[%s353 + $0x178] sm:$0xff] %v2796
        %s2845 = sand.u32 %s154, 1
        %s2846 = scalar_lea.sflag [#allocation4], %s2845
        %s2847 = sand.u32 %s154, 1
        %s2848 = smul.addr %s2847, 384
        %s2849 = scalar_lea.vmem [#allocation10], %s2848
        // Predicated region
        $region57: #{tpu_custom_call.1} parent=39 // pred_check
          %p2850 = pneg %p164
        $region58: #{tpu_custom_call.1} parent=39 // pred_check_branch
          %2852 = sbr.rel (%p2850) target = $region60
        $region59: #{tpu_custom_call.1} parent=39 // pred_region
          %s2853 = smul.u32 24, %s26
          %s2854 = ssub.s32 141, %s2853
          %p2855 = scmp.lt.s32.totalorder %s2854, 24
          %s2856 = scalar_select %p2855, %s2854, 24
          %s2857 = smul.u32 128, %s2856
          %s2858 = smul.u32 %s2857, 2
          %s2860 = ssub.s32 6144, %s2858
          %2861 = vsyncadd %s2846, %s2860
          %p2862 = scmp.ne.s32.totalorder 0, %s2858
          %s2863 = smul.addr %s2853, 2
          %s2864 = smul.addr %s2863, 128
          %s2865 = scalar_lea.hbm %s5, %s2864
          %s2866 = smul.u32 16, %s2856
          %s2867 = sshll.u32 %s2849, 4
          %s2868 = int_to_ptr.vmem [resolvable:$true] %s2867
          %s2869 = sshll.u32 %s2866, 4
          %2873 = dma.vmem_to_hbm [thread:$0]  (%p2862), %s2868, %s2869, %s2865, %s2846, 256, 256, 16
        $region60: #{tpu_custom_call.1} parent=39 // pred_fallthru
          _
      $region40: #{tpu_custom_call.1} parent=5 // pred_fallthru
        _
      %p2874 = scmp.le.s32.totalorder 2, %s21
      // Predicated region
      $region61: #{tpu_custom_call.1} parent=5 // pred_check
        %p2875 = pneg %p2874
      $region62: #{tpu_custom_call.1} parent=5 // pred_check_branch
        %2877 = sbr.rel (%p2875) target = $region64
      $region63: #{tpu_custom_call.1} parent=5 // pred_region
        %s2878 = ssub.s32 %s21, 2
        // Predicated region
        $region65: #{tpu_custom_call.1} parent=63 // pred_check
          %p2879 = pneg %p170
        $region66: #{tpu_custom_call.1} parent=63 // pred_check_branch
          %2881 = sbr.rel (%p2879) target = $region68
        $region67: #{tpu_custom_call.1} parent=63 // pred_region
          %s2882 = sand.u32 %s155, 1
          %s2883 = scalar_lea.sflag [#allocation4], %s2882
          %s2884 = sand.u32 %s155, 1
          %s2885 = smul.addr %s2884, 384
          %s2886 = scalar_lea.vmem [#allocation10], %s2885
          %2887 = dma.done %s2883, 6144
        $region68: #{tpu_custom_call.1} parent=63 // pred_fallthru
          _
      $region64: #{tpu_custom_call.1} parent=5 // pred_fallthru
        _
    $region6: #{tpu_custom_call.1} parent=1 // loop_footer
      %s25 = sadd.s32 1, %s21
    $region7: #{tpu_custom_call.1} parent=1 // loop_footer_branch
      %20 = sbr.rel target = $region3
    $region8: #{tpu_custom_call.1} parent=1 // loop_exit
      _
    %2888 = vsyncpa [#allocation3], 1
    %s2889 = scalar_lea.sflag [#allocation3], 1
    %2890 = vsyncpa %s2889, 1
    %2891 = vsyncpa [#allocation6], 1
    %s2892 = scalar_lea.sflag [#allocation6], 1
    %2893 = vsyncpa %s2892, 1
    %2894 = vsyncpa [#allocation9], 1
    %2895 = vsyncpa [#allocation4], 1
    %s2896 = scalar_lea.sflag [#allocation4], 1
    %2897 = vsyncpa %s2896, 1

</llo_original>
